<compile_context>
chip_gen: v6e
topology: v6e:2x2x1
jax: 0.10.0
libtpu: 0.0.40
codegen_flags: <defaults>
</compile_context>

<pallas_src>
import jax
import jax.numpy as jnp
from jax.experimental import pallas as pl
from jax.experimental.pallas import tpu as pltpu


def _resblock_conv3x3_kernel(xwin_ref, w_ref, b_ref, out_ref):
    """One (batch, row-tile) grid step.

    xwin_ref: (tile_h + 2, W + 2, C)   halo window of the padded NHWC input
    w_ref:    (9, C, C)                conv taps, index = 3*dy + dx, (Cin, Cout)
    b_ref:    (1, C)                   conv bias (f32)
    out_ref:  (tile_h * W, C)          conv(x) + bias + x for this tile
    """
    x = xwin_ref[...]
    th2, wp2, c = x.shape
    tile_h, w = th2 - 2, wp2 - 2
    m = tile_h * w

    acc = jnp.zeros((m, c), jnp.float32)
    center = None
    for dy in range(3):                          # 9 taps, statically unrolled
        for dx in range(3):
            xs = x[dy:dy + tile_h, dx:dx + w, :].reshape(m, c)
            if dy == 1 and dx == 1:
                center = xs                      # residual = untouched input
            acc = acc + jnp.dot(xs, w_ref[3 * dy + dx],
                                preferred_element_type=jnp.float32)

    y = acc + b_ref[...] + center.astype(jnp.float32)   # f32 epilogue
    out_ref[...] = y.astype(out_ref.dtype)


def res_block_forward_nhwc(x_nhwc, weight, bias, *, tile_h=8,
                           compute_dtype=jnp.float32):
    """ResBlock(Conv2d(C, C, 3, padding=1)) forward, NHWC layout.

    For larger problems pick tile_h so tile_h * W ~ 512 matmul rows.
    """
    N, H, W, C = x_nhwc.shape
    c_out, c_in, kh, kw = weight.shape
    assert c_out == C and c_in == C and kh == 3 and kw == 3

    tile_h = max(1, min(tile_h, H))
    T = pl.cdiv(H, tile_h)
    Hp = T * tile_h                      # H rounded up to the row-tile size

    # "same" padding=1, plus bottom rows so every row-tile is full height.
    x_pad = jnp.pad(x_nhwc, ((0, 0), (1, Hp - H + 1), (1, 1), (0, 0)))

    # Overlapping halo windows (N, T, tile_h+2, W+2, C): only the 2 halo rows
    # per tile are duplicated (vs. the 9x blow-up of a materialised im2col).
    row_idx = (jnp.arange(T, dtype=jnp.int32)[:, None] * tile_h
               + jnp.arange(tile_h + 2, dtype=jnp.int32)[None, :])
    windows = x_pad[:, row_idx].astype(compute_dtype)

    # torch Conv2d weight (Cout, Cin, kh, kw) -> (kh*kw, Cin, Cout).
    w9 = jnp.transpose(weight, (2, 3, 1, 0)).reshape(9, C, C).astype(compute_dtype)
    b_row = bias.reshape(1, C).astype(jnp.float32)

    itemsize = jnp.dtype(compute_dtype).itemsize
    flops = 2 * N * Hp * W * 9 * C * C
    bytes_accessed = (N * T * (tile_h + 2) * (W + 2) * C * itemsize   # windows
                      + 9 * C * C * itemsize + C * 4                  # params
                      + N * Hp * W * C * 4)                           # output

    out_flat = pl.pallas_call(
        _resblock_conv3x3_kernel,
        out_shape=jax.ShapeDtypeStruct((N, Hp * W, C), jnp.float32),
        grid=(N, T),
        in_specs=[
            # Halo window for this (n, t) tile; leading dims squeezed away.
            pl.BlockSpec((None, None, tile_h + 2, W + 2, C),
                         lambda n, t: (n, t, 0, 0, 0)),
            # Weights / bias: constant index map -> fetched once, resident.
            pl.BlockSpec((9, C, C), lambda n, t: (0, 0, 0)),
            pl.BlockSpec((1, C), lambda n, t: (0, 0)),
        ],
        out_specs=pl.BlockSpec((None, tile_h * W, C), lambda n, t: (n, t, 0)),
        compiler_params=pltpu.CompilerParams(
            dimension_semantics=("parallel", "parallel"),
            vmem_limit_bytes=32 * 1024 * 1024),
        cost_estimate=pl.CostEstimate(flops=flops, transcendentals=0,
                                      bytes_accessed=bytes_accessed),
    )(windows, w9, b_row)

    return out_flat.reshape(N, Hp, W, C)[:, :H]


def res_block_forward(x_nchw, weight, bias, *, tile_h=8,
                      compute_dtype=jnp.float32):
    """PyTorch-layout (NCHW) entry point.

    The NCHW<->NHWC transposes are XLA-side layout plumbing kept only for
    parity with the PyTorch module; NHWC callers should call
    res_block_forward_nhwc directly and skip both full-tensor passes.
    """
    x_nhwc = jnp.transpose(x_nchw, (0, 2, 3, 1))
    out_nhwc = res_block_forward_nhwc(x_nhwc, weight, bias, tile_h=tile_h,
                                      compute_dtype=compute_dtype)
    return jnp.transpose(out_nhwc, (0, 3, 1, 2))


def _reference(x_nchw, weight, bias):
    # Pure-JAX reference: conv2d (padding=1) + bias + residual, NCHW semantics.
    y = jax.lax.conv_general_dilated(
        x_nchw, weight, window_strides=(1, 1), padding=((1, 1), (1, 1)),
        dimension_numbers=("NCHW", "OIHW", "NCHW"))
    return y + bias[None, :, None, None] + x_nchw


if __name__ == "__main__":
    key = jax.random.PRNGKey(0)
    k_x, k_w, k_b = jax.random.split(key, 3)

    N, C, H, W = 2, 4, 16, 16
    x = jax.random.normal(k_x, (N, C, H, W), dtype=jnp.float32)
    # Deterministic synthetic parameters (Conv2d(C, C, 3, padding=1) shapes).
    weight = jax.random.normal(k_w, (C, C, 3, 3), dtype=jnp.float32) * 0.1
    bias = jax.random.normal(k_b, (C,), dtype=jnp.float32) * 0.1

    out = jax.jit(res_block_forward)(x, weight, bias)
    out = jax.block_until_ready(out)

    ref = _reference(x, weight, bias)
    assert out.shape == (N, C, H, W)
    assert jnp.allclose(out, ref, atol=1e-4, rtol=1e-4), "mismatch vs reference"

    print("KERNEL_OK")
</pallas_src>

<mosaic_0001>
module attributes {stable_mosaic.version = 11 : i64} {
  func.func @_resblock_conv3x3_kernel(%arg0: i32, %arg1: i32, %arg2: memref<1x1x10x18x4xf32, #tpu.memory_space<vmem>>, %arg3: memref<9x4x4xf32, #tpu.memory_space<vmem>>, %arg4: memref<1x4xf32, #tpu.memory_space<vmem>>, %arg5: memref<1x128x4xf32, #tpu.memory_space<vmem>>) attributes {dimension_semantics = [#tpu.dimension_semantics<parallel>, #tpu.dimension_semantics<parallel>], iteration_bounds = array<i64: 2, 2>, scalar_prefetch = 0 : i64, scratch_operands = 0 : i64, tpu.core_type = #tpu.core_type<tc>, window_params = [{transform_indices = @transform_0, window_bounds = array<i64: 1, 1, 10, 18, 4>}, {pipeline_mode = #tpu.pipeline_mode<synchronous>, transform_indices = @transform_1, window_bounds = array<i64: 9, 4, 4>}, {pipeline_mode = #tpu.pipeline_mode<synchronous>, transform_indices = @transform_2, window_bounds = array<i64: 1, 4>}, {transform_indices = @transform_3, window_bounds = array<i64: 1, 128, 4>}]} {
    %c0 = arith.constant 0 : index
    %c0_0 = arith.constant 0 : index
    %c0_1 = arith.constant 0 : index
    %c0_2 = arith.constant 0 : index
    %c0_3 = arith.constant 0 : index
    %0 = vector.load %arg2[%c0, %c0_0, %c0_1, %c0_2, %c0_3] : memref<1x1x10x18x4xf32, #tpu.memory_space<vmem>>, vector<1x1x10x18x4xf32>
    %1 = vector.shape_cast %0 : vector<1x1x10x18x4xf32> to vector<10x18x4xf32>
    %cst = arith.constant 0.000000e+00 : f32
    %2 = vector.broadcast %cst : f32 to vector<128x4xf32>
    %3 = vector.extract_strided_slice %1 {offsets = [0, 0, 0], sizes = [8, 16, 4], strides = [1, 1, 1]} : vector<10x18x4xf32> to vector<8x16x4xf32>
    %4 = vector.shape_cast %3 : vector<8x16x4xf32> to vector<128x4xf32>
    %c0_4 = arith.constant 0 : index
    %c0_5 = arith.constant 0 : index
    %c0_6 = arith.constant 0 : index
    %5 = vector.load %arg3[%c0_4, %c0_5, %c0_6] : memref<9x4x4xf32, #tpu.memory_space<vmem>>, vector<1x4x4xf32>
    %6 = vector.shape_cast %5 : vector<1x4x4xf32> to vector<4x4xf32>
    %cst_7 = arith.constant dense<0.000000e+00> : vector<128x4xf32>
    %7 = tpu.matmul %4, %6, %cst_7 {dimension_numbers = #tpu.dot_dimension_numbers<[1], [0], [0], [1], [0, 0, 1, 1], [], []>} : vector<128x4xf32>, vector<4x4xf32>, vector<128x4xf32> -> vector<128x4xf32>
    %8 = arith.addf %2, %7 : vector<128x4xf32>
    %9 = vector.extract_strided_slice %1 {offsets = [0, 1, 0], sizes = [8, 16, 4], strides = [1, 1, 1]} : vector<10x18x4xf32> to vector<8x16x4xf32>
    %10 = vector.shape_cast %9 : vector<8x16x4xf32> to vector<128x4xf32>
    %c1 = arith.constant 1 : index
    %c0_8 = arith.constant 0 : index
    %c0_9 = arith.constant 0 : index
    %11 = vector.load %arg3[%c1, %c0_8, %c0_9] : memref<9x4x4xf32, #tpu.memory_space<vmem>>, vector<1x4x4xf32>
    %12 = vector.shape_cast %11 : vector<1x4x4xf32> to vector<4x4xf32>
    %cst_10 = arith.constant dense<0.000000e+00> : vector<128x4xf32>
    %13 = tpu.matmul %10, %12, %cst_10 {dimension_numbers = #tpu.dot_dimension_numbers<[1], [0], [0], [1], [0, 0, 1, 1], [], []>} : vector<128x4xf32>, vector<4x4xf32>, vector<128x4xf32> -> vector<128x4xf32>
    %14 = arith.addf %8, %13 : vector<128x4xf32>
    %15 = vector.extract_strided_slice %1 {offsets = [0, 2, 0], sizes = [8, 16, 4], strides = [1, 1, 1]} : vector<10x18x4xf32> to vector<8x16x4xf32>
    %16 = vector.shape_cast %15 : vector<8x16x4xf32> to vector<128x4xf32>
    %c2 = arith.constant 2 : index
    %c0_11 = arith.constant 0 : index
    %c0_12 = arith.constant 0 : index
    %17 = vector.load %arg3[%c2, %c0_11, %c0_12] : memref<9x4x4xf32, #tpu.memory_space<vmem>>, vector<1x4x4xf32>
    %18 = vector.shape_cast %17 : vector<1x4x4xf32> to vector<4x4xf32>
    %cst_13 = arith.constant dense<0.000000e+00> : vector<128x4xf32>
    %19 = tpu.matmul %16, %18, %cst_13 {dimension_numbers = #tpu.dot_dimension_numbers<[1], [0], [0], [1], [0, 0, 1, 1], [], []>} : vector<128x4xf32>, vector<4x4xf32>, vector<128x4xf32> -> vector<128x4xf32>
    %20 = arith.addf %14, %19 : vector<128x4xf32>
    %21 = vector.extract_strided_slice %1 {offsets = [1, 0, 0], sizes = [8, 16, 4], strides = [1, 1, 1]} : vector<10x18x4xf32> to vector<8x16x4xf32>
    %22 = vector.shape_cast %21 : vector<8x16x4xf32> to vector<128x4xf32>
    %c3 = arith.constant 3 : index
    %c0_14 = arith.constant 0 : index
    %c0_15 = arith.constant 0 : index
    %23 = vector.load %arg3[%c3, %c0_14, %c0_15] : memref<9x4x4xf32, #tpu.memory_space<vmem>>, vector<1x4x4xf32>
    %24 = vector.shape_cast %23 : vector<1x4x4xf32> to vector<4x4xf32>
    %cst_16 = arith.constant dense<0.000000e+00> : vector<128x4xf32>
    %25 = tpu.matmul %22, %24, %cst_16 {dimension_numbers = #tpu.dot_dimension_numbers<[1], [0], [0], [1], [0, 0, 1, 1], [], []>} : vector<128x4xf32>, vector<4x4xf32>, vector<128x4xf32> -> vector<128x4xf32>
    %26 = arith.addf %20, %25 : vector<128x4xf32>
    %27 = vector.extract_strided_slice %1 {offsets = [1, 1, 0], sizes = [8, 16, 4], strides = [1, 1, 1]} : vector<10x18x4xf32> to vector<8x16x4xf32>
    %28 = vector.shape_cast %27 : vector<8x16x4xf32> to vector<128x4xf32>
    %c4 = arith.constant 4 : index
    %c0_17 = arith.constant 0 : index
    %c0_18 = arith.constant 0 : index
    %29 = vector.load %arg3[%c4, %c0_17, %c0_18] : memref<9x4x4xf32, #tpu.memory_space<vmem>>, vector<1x4x4xf32>
    %30 = vector.shape_cast %29 : vector<1x4x4xf32> to vector<4x4xf32>
    %cst_19 = arith.constant dense<0.000000e+00> : vector<128x4xf32>
    %31 = tpu.matmul %28, %30, %cst_19 {dimension_numbers = #tpu.dot_dimension_numbers<[1], [0], [0], [1], [0, 0, 1, 1], [], []>} : vector<128x4xf32>, vector<4x4xf32>, vector<128x4xf32> -> vector<128x4xf32>
    %32 = arith.addf %26, %31 : vector<128x4xf32>
    %33 = vector.extract_strided_slice %1 {offsets = [1, 2, 0], sizes = [8, 16, 4], strides = [1, 1, 1]} : vector<10x18x4xf32> to vector<8x16x4xf32>
    %34 = vector.shape_cast %33 : vector<8x16x4xf32> to vector<128x4xf32>
    %c5 = arith.constant 5 : index
    %c0_20 = arith.constant 0 : index
    %c0_21 = arith.constant 0 : index
    %35 = vector.load %arg3[%c5, %c0_20, %c0_21] : memref<9x4x4xf32, #tpu.memory_space<vmem>>, vector<1x4x4xf32>
    %36 = vector.shape_cast %35 : vector<1x4x4xf32> to vector<4x4xf32>
    %cst_22 = arith.constant dense<0.000000e+00> : vector<128x4xf32>
    %37 = tpu.matmul %34, %36, %cst_22 {dimension_numbers = #tpu.dot_dimension_numbers<[1], [0], [0], [1], [0, 0, 1, 1], [], []>} : vector<128x4xf32>, vector<4x4xf32>, vector<128x4xf32> -> vector<128x4xf32>
    %38 = arith.addf %32, %37 : vector<128x4xf32>
    %39 = vector.extract_strided_slice %1 {offsets = [2, 0, 0], sizes = [8, 16, 4], strides = [1, 1, 1]} : vector<10x18x4xf32> to vector<8x16x4xf32>
    %40 = vector.shape_cast %39 : vector<8x16x4xf32> to vector<128x4xf32>
    %c6 = arith.constant 6 : index
    %c0_23 = arith.constant 0 : index
    %c0_24 = arith.constant 0 : index
    %41 = vector.load %arg3[%c6, %c0_23, %c0_24] : memref<9x4x4xf32, #tpu.memory_space<vmem>>, vector<1x4x4xf32>
    %42 = vector.shape_cast %41 : vector<1x4x4xf32> to vector<4x4xf32>
    %cst_25 = arith.constant dense<0.000000e+00> : vector<128x4xf32>
    %43 = tpu.matmul %40, %42, %cst_25 {dimension_numbers = #tpu.dot_dimension_numbers<[1], [0], [0], [1], [0, 0, 1, 1], [], []>} : vector<128x4xf32>, vector<4x4xf32>, vector<128x4xf32> -> vector<128x4xf32>
    %44 = arith.addf %38, %43 : vector<128x4xf32>
    %45 = vector.extract_strided_slice %1 {offsets = [2, 1, 0], sizes = [8, 16, 4], strides = [1, 1, 1]} : vector<10x18x4xf32> to vector<8x16x4xf32>
    %46 = vector.shape_cast %45 : vector<8x16x4xf32> to vector<128x4xf32>
    %c7 = arith.constant 7 : index
    %c0_26 = arith.constant 0 : index
    %c0_27 = arith.constant 0 : index
    %47 = vector.load %arg3[%c7, %c0_26, %c0_27] : memref<9x4x4xf32, #tpu.memory_space<vmem>>, vector<1x4x4xf32>
    %48 = vector.shape_cast %47 : vector<1x4x4xf32> to vector<4x4xf32>
    %cst_28 = arith.constant dense<0.000000e+00> : vector<128x4xf32>
    %49 = tpu.matmul %46, %48, %cst_28 {dimension_numbers = #tpu.dot_dimension_numbers<[1], [0], [0], [1], [0, 0, 1, 1], [], []>} : vector<128x4xf32>, vector<4x4xf32>, vector<128x4xf32> -> vector<128x4xf32>
    %50 = arith.addf %44, %49 : vector<128x4xf32>
    %51 = vector.extract_strided_slice %1 {offsets = [2, 2, 0], sizes = [8, 16, 4], strides = [1, 1, 1]} : vector<10x18x4xf32> to vector<8x16x4xf32>
    %52 = vector.shape_cast %51 : vector<8x16x4xf32> to vector<128x4xf32>
    %c8 = arith.constant 8 : index
    %c0_29 = arith.constant 0 : index
    %c0_30 = arith.constant 0 : index
    %53 = vector.load %arg3[%c8, %c0_29, %c0_30] : memref<9x4x4xf32, #tpu.memory_space<vmem>>, vector<1x4x4xf32>
    %54 = vector.shape_cast %53 : vector<1x4x4xf32> to vector<4x4xf32>
    %cst_31 = arith.constant dense<0.000000e+00> : vector<128x4xf32>
    %55 = tpu.matmul %52, %54, %cst_31 {dimension_numbers = #tpu.dot_dimension_numbers<[1], [0], [0], [1], [0, 0, 1, 1], [], []>} : vector<128x4xf32>, vector<4x4xf32>, vector<128x4xf32> -> vector<128x4xf32>
    %56 = arith.addf %50, %55 : vector<128x4xf32>
    %c0_32 = arith.constant 0 : index
    %c0_33 = arith.constant 0 : index
    %57 = vector.load %arg4[%c0_32, %c0_33] : memref<1x4xf32, #tpu.memory_space<vmem>>, vector<1x4xf32>
    %58 = vector.broadcast %57 : vector<1x4xf32> to vector<128x4xf32>
    %59 = arith.addf %56, %58 : vector<128x4xf32>
    %60 = arith.addf %59, %28 : vector<128x4xf32>
    %c0_34 = arith.constant 0 : index
    %c0_35 = arith.constant 0 : index
    %c0_36 = arith.constant 0 : index
    %61 = vector.load %arg5[%c0_34, %c0_35, %c0_36] : memref<1x128x4xf32, #tpu.memory_space<vmem>>, vector<1x128x4xf32>
    %62 = vector.shape_cast %61 : vector<1x128x4xf32> to vector<128x4xf32>
    %63 = vector.shape_cast %60 : vector<128x4xf32> to vector<1x128x4xf32>
    tpu.vector_store %arg5[%c0_34, %c0_35, %c0_36], %63 {strides = array<i32>} : memref<1x128x4xf32, #tpu.memory_space<vmem>>, vector<1x128x4xf32>,
    return
  }
  func.func @transform_0(%arg0: i32, %arg1: i32) -> (i32, i32, i32, i32, i32) {
    %c0_i32 = arith.constant 0 : i32
    %c0_i32_0 = arith.constant 0 : i32
    %c0_i32_1 = arith.constant 0 : i32
    %c0_i32_2 = arith.constant 0 : i32
    return %arg0, %arg1, %c0_i32, %c0_i32_0, %c0_i32_1 : i32, i32, i32, i32, i32
  }
  func.func @transform_1(%arg0: i32, %arg1: i32) -> (i32, i32, i32) {
    %c0_i32 = arith.constant 0 : i32
    %c0_i32_0 = arith.constant 0 : i32
    %c0_i32_1 = arith.constant 0 : i32
    %c0_i32_2 = arith.constant 0 : i32
    return %c0_i32, %c0_i32_0, %c0_i32_1 : i32, i32, i32
  }
  func.func @transform_2(%arg0: i32, %arg1: i32) -> (i32, i32) {
    %c0_i32 = arith.constant 0 : i32
    %c0_i32_0 = arith.constant 0 : i32
    %c0_i32_1 = arith.constant 0 : i32
    return %c0_i32, %c0_i32_0 : i32, i32
  }
  func.func @transform_3(%arg0: i32, %arg1: i32) -> (i32, i32, i32) {
    %c0_i32 = arith.constant 0 : i32
    %c0_i32_0 = arith.constant 0 : i32
    return %arg0, %arg1, %c0_i32 : i32, i32, i32
  }
}

</mosaic_0001>

<llo_original>
// kernel: res_block_forward.1
$region0: #{res_block_forward.1}
  #allocation0 [shape = 'u32[]', space=smem, size = 0x4, offset = 0x4, fixed_abs, tag = 'smem constant byte address 0x4 - core index']
  #allocation1 [shape = 'u32[144,128]{1,0:T(1,128)}', space=vmem, size = 0x12000, scoped, tag = 'internal scratch']
  %s0 = inlined_call_operand.vmem [shape: f32[2,2,10,18,4], index: 0, kind: input, shape index: {}]
  %s1 = inlined_call_operand.vmem [shape: f32[9,4,4], index: 1, kind: input, shape index: {}]
  %s2 = inlined_call_operand.vmem [shape: f32[1,4], index: 2, kind: input, shape index: {}]
  %s3 = inlined_call_operand.vmem [shape: f32[2,256,4], index: 3, kind: output, shape index: {}]
  %s4 = sld [smem:[#allocation0]]
  $region45: #{res_block_forward.1} parent=0
    _
  %s6 = ssub.s32 1, %s4
  %s7 = scalar_select 0, %s6, %s4
  loop: start=0, step=1, limit=6
  $region2: #{res_block_forward.1} parent=0 // loop_pre_header
    _
  $region3: #{res_block_forward.1} parent=0 // loop_header
    %s9 = sphi 0, %s13
    %p10 = scmp.ge.s32.totalorder %s9, 6
    %s16 = sphi 0, %s28
    %s17 = sphi 0, %s24
    %s18 = sphi 0, %s16
    %s19 = sphi 0, %s17
    %s20 = sphi 0, %s18
    %s21 = sphi 0, %s19
    %s33 = sphi 0, %s35
    %s36 = sphi 0, %s33
    %s37 = sphi 0, %s36
    %s53 = sphi 0, %s37
    %s57 = sphi 0, %s57
    %s59 = sphi 0, %s57
    %s60 = sphi 0, %s59
    %s74 = sphi 0, %s60
    %s78 = sphi 0, %s78
    %s80 = sphi 0, %s78
    %s81 = sphi 0, %s80
    %s95 = sphi 0, %s81
    %s103 = sphi 0, %s105
    %s106 = sphi 0, %s103
    %s107 = sphi 0, %s106
    %s123 = sphi 0, %s107
  $region4: #{res_block_forward.1} parent=0 // loop_header_branch
    %12 = sbr.rel (%p10) target = $region8
  $region5: #{res_block_forward.1} parent=0 // loop_body
    %s14 = ssub.s32 %s9, 1
    %s15 = ssub.s32 %s9, 2
    %s22 = sadd.s32 1, %s17
    %p23 = scmp.ge.s32.totalorder %s22, 2
    %s24 = scalar_select %p23, 0, %s22
    %s25 = sadd.s32 1, %s16
    %s26 = scalar_select %p23, %s25, %s16
    %p27 = scmp.ge.s32.totalorder %s26, 2
    %s28 = scalar_select %p27, 0, %s26
    %s29 = ssub.s32 %s16, %s28
    %s30 = ssub.s32 %s17, %s24
    %s31 = sor.u32 %s29, %s30
    %p32 = scmp.eq.s32.totalorder %s31, 0
    %s34 = sadd.s32 %s33, 1
    %s35 = scalar_select %p32, %s33, %s34
    %p38 = pneg %p32
    %p39 = scmp.eq.s32.totalorder %s9, 3
    %p40 = por %p38, %p39
    %p41 = scmp.ne.s32.totalorder %s33, %s36
    %p42 = scmp.eq.s32.totalorder %s9, 0
    %p43 = por %p41, %p42
    %p44 = scmp.ne.s32.totalorder %s33, %s36
    %p45 = scmp.eq.s32.totalorder %s14, 3
    %p46 = por %p44, %p45
    %p47 = scmp.ne.s32.totalorder %s36, %s37
    %p48 = scmp.eq.s32.totalorder %s14, 0
    %p49 = por %p47, %p48
    %p50 = scmp.ne.s32.totalorder %s36, %s37
    %p51 = scmp.eq.s32.totalorder %s15, 3
    %p52 = por %p50, %p51
    %p54 = scmp.ne.s32.totalorder %s37, %s53
    %p55 = scmp.eq.s32.totalorder %s15, 0
    %p56 = por %p54, %p55
    %s58 = sadd.s32 %s57, 1
    %p61 = scmp.eq.s32.totalorder %s9, 3
    %p62 = scmp.ne.s32.totalorder %s57, %s59
    %p63 = scmp.eq.s32.totalorder %s9, 0
    %p64 = por %p62, %p63
    %p65 = scmp.ne.s32.totalorder %s57, %s59
    %p66 = scmp.eq.s32.totalorder %s14, 3
    %p67 = por %p65, %p66
    %p68 = scmp.ne.s32.totalorder %s59, %s60
    %p69 = scmp.eq.s32.totalorder %s14, 0
    %p70 = por %p68, %p69
    %p71 = scmp.ne.s32.totalorder %s59, %s60
    %p72 = scmp.eq.s32.totalorder %s15, 3
    %p73 = por %p71, %p72
    %p75 = scmp.ne.s32.totalorder %s60, %s74
    %p76 = scmp.eq.s32.totalorder %s15, 0
    %p77 = por %p75, %p76
    %s79 = sadd.s32 %s78, 1
    %p82 = scmp.eq.s32.totalorder %s9, 3
    %p83 = scmp.ne.s32.totalorder %s78, %s80
    %p84 = scmp.eq.s32.totalorder %s9, 0
    %p85 = por %p83, %p84
    %p86 = scmp.ne.s32.totalorder %s78, %s80
    %p87 = scmp.eq.s32.totalorder %s14, 3
    %p88 = por %p86, %p87
    %p89 = scmp.ne.s32.totalorder %s80, %s81
    %p90 = scmp.eq.s32.totalorder %s14, 0
    %p91 = por %p89, %p90
    %p92 = scmp.ne.s32.totalorder %s80, %s81
    %p93 = scmp.eq.s32.totalorder %s15, 3
    %p94 = por %p92, %p93
    %p96 = scmp.ne.s32.totalorder %s81, %s95
    %p97 = scmp.eq.s32.totalorder %s15, 0
    %p98 = por %p96, %p97
    %s99 = ssub.s32 %s16, %s28
    %s100 = ssub.s32 %s17, %s24
    %s101 = sor.u32 %s99, %s100
    %p102 = scmp.eq.s32.totalorder %s101, 0
    %s104 = sadd.s32 %s103, 1
    %s105 = scalar_select %p102, %s103, %s104
    %p108 = pneg %p102
    %p109 = scmp.eq.s32.totalorder %s9, 3
    %p110 = por %p108, %p109
    %p111 = scmp.ne.s32.totalorder %s103, %s106
    %p112 = scmp.eq.s32.totalorder %s9, 0
    %p113 = por %p111, %p112
    %p114 = scmp.ne.s32.totalorder %s103, %s106
    %p115 = scmp.eq.s32.totalorder %s14, 3
    %p116 = por %p114, %p115
    %p117 = scmp.ne.s32.totalorder %s106, %s107
    %p118 = scmp.eq.s32.totalorder %s14, 0
    %p119 = por %p117, %p118
    %p120 = scmp.ne.s32.totalorder %s106, %s107
    %p121 = scmp.eq.s32.totalorder %s15, 3
    %p122 = por %p120, %p121
    %p124 = scmp.ne.s32.totalorder %s107, %s123
    %p125 = scmp.eq.s32.totalorder %s15, 0
    %p126 = por %p124, %p125
    %p127 = scmp.le.s32.totalorder 1, %s9
    %p128 = scmp.lt.s32.totalorder %s9, 5
    %p129 = pnand %p127, %p128
    %p130 = pneg %p129
    // Predicated region
    $region9: #{res_block_forward.1} parent=5 // pred_check
      _
    $region10: #{res_block_forward.1} parent=5 // pred_check_branch
      %132 = sbr.rel (%p129) target = $region12
    $region11: #{res_block_forward.1} parent=5 // pred_region
      %s133 = ssub.s32 %s9, 1
      // Predicated region
      $region13: #{res_block_forward.1} parent=11 // pred_check
        %p134 = pneg %p70
      $region14: #{res_block_forward.1} parent=11 // pred_check_branch
        %136 = sbr.rel (%p134) target = $region16
      $region15: #{res_block_forward.1} parent=11 // pred_region
        _
      $region16: #{res_block_forward.1} parent=11 // pred_fallthru
        _
      // Predicated region
      $region17: #{res_block_forward.1} parent=11 // pred_check
        %p137 = pneg %p91
      $region18: #{res_block_forward.1} parent=11 // pred_check_branch
        %139 = sbr.rel (%p137) target = $region20
      $region19: #{res_block_forward.1} parent=11 // pred_region
        _
      $region20: #{res_block_forward.1} parent=11 // pred_fallthru
        _
    $region12: #{res_block_forward.1} parent=5 // pred_fallthru
      _
    %p140 = scmp.lt.s32.totalorder %s9, 4
    // Predicated region
    $region21: #{res_block_forward.1} parent=5 // pred_check
      %p141 = pneg %p140
    $region22: #{res_block_forward.1} parent=5 // pred_check_branch
      %143 = sbr.rel (%p141) target = $region24
    $region23: #{res_block_forward.1} parent=5 // pred_region
      // Predicated region
      $region25: #{res_block_forward.1} parent=23 // pred_check
        %p144 = pneg %p43
      $region26: #{res_block_forward.1} parent=23 // pred_check_branch
        %146 = sbr.rel (%p144) target = $region28
      $region27: #{res_block_forward.1} parent=23 // pred_region
        %p147 = scmp.lt.s32.totalorder %s16, 1
        %s148 = scalar_select %p147, %s16, 1
        %p149 = scmp.lt.s32.totalorder %s17, 1
        %s150 = scalar_select %p149, %s17, 1
        %s151 = smul.addr %s150, 30
        %s152 = smul.addr %s148, 60
        %s153 = sadd.s32 %s151, %s152
        %s154 = smul.addr %s153, 8
        %s155 = scalar_lea.vmem %s0, %s154
      $region28: #{res_block_forward.1} parent=23 // pred_fallthru
        _
    $region24: #{res_block_forward.1} parent=5 // pred_fallthru
      _
    %p156 = scmp.le.s32.totalorder 1, %s9
    %p157 = scmp.lt.s32.totalorder %s9, 5
    %p158 = pnand %p156, %p157
    %p159 = pneg %p158
    // Predicated region
    $region29: #{res_block_forward.1} parent=5 // pred_check
      _
    $region30: #{res_block_forward.1} parent=5 // pred_check_branch
      %161 = sbr.rel (%p158) target = $region32
    $region31: #{res_block_forward.1} parent=5 // pred_region
      %s162 = ssub.s32 %s9, 1
      %p163 = scmp.lt.s32.totalorder %s18, 1
      %s164 = scalar_select %p163, %s18, 1
      %p165 = scmp.lt.s32.totalorder %s19, 1
      %s166 = scalar_select %p165, %s19, 1
      %s167 = smul.addr %s166, 30
      %s168 = smul.addr %s164, 60
      %s169 = sadd.s32 %s167, %s168
      %s170 = smul.addr %s169, 8
      %s171 = scalar_lea.vmem %s0, %s170
      %p172 = pneg %p49
      %p173 = pneg %p46
      %p174 = pneg %p70
      %p175 = pneg %p67
      %p176 = pneg %p91
      %p177 = pneg %p88
      %p178 = pneg %p119
      %p179 = pneg %p116
      %s180 = smul.u32 16, %s19
      %p181 = scmp.lt.s32.totalorder %s18, 1
      %s182 = scalar_select %p181, %s18, 1
      %p183 = scmp.lt.s32.totalorder %s180, 31
      %s184 = scalar_select %p183, %s180, 31
      %s185 = smul.addr %s182, 32
      %s186 = sadd.s32 %s184, %s185
      %s187 = smul.addr %s186, 8
      %s188 = scalar_lea.vmem %s3, %s187
      %p189 = scmp.lt.s32.totalorder %s18, 1
      %s190 = scalar_select %p189, %s18, 1
      %p191 = scmp.lt.s32.totalorder %s19, 1
      %s192 = scalar_select %p191, %s19, 1
      %s193 = smul.addr %s192, 30
      %s194 = smul.addr %s190, 60
      %s195 = sadd.s32 %s193, %s194
      %s196 = smul.addr %s195, 8
      %s197 = scalar_lea.vmem %s0, %s196
      %s198 = smul.u32 16, %s19
      %p199 = scmp.lt.s32.totalorder %s18, 1
      %s200 = scalar_select %p199, %s18, 1
      %p201 = scmp.lt.s32.totalorder %s198, 31
      %s202 = scalar_select %p201, %s198, 31
      %s203 = smul.addr %s200, 32
      %s204 = sadd.s32 %s202, %s203
      %s205 = smul.addr %s204, 8
      %s206 = scalar_lea.vmem %s3, %s205
      %s207 = smul.u32 16, %s19
      %v208 = vld [vmem:[%s197] sm:$0xff]
      %v209 = vld [vmem:[%s197 + $0x8] sm:$0xff]
      %v210 = vld [vmem:[%s197 + $0x10] sm:$0x3]
      %v211 = vld [vmem:[%s197 + $0x18] sm:$0xff]
      %v212 = vld [vmem:[%s197 + $0x20] sm:$0xff]
      %v213 = vld [vmem:[%s197 + $0x28] sm:$0x3]
      %v214 = vld [vmem:[%s197 + $0x30] sm:$0xff]
      %v215 = vld [vmem:[%s197 + $0x38] sm:$0xff]
      %v216 = vld [vmem:[%s197 + $0x40] sm:$0x3]
      %v217 = vld [vmem:[%s197 + $0x48] sm:$0xff]
      %v218 = vld [vmem:[%s197 + $0x50] sm:$0xff]
      %v219 = vld [vmem:[%s197 + $0x58] sm:$0x3]
      %v220 = vld [vmem:[%s197 + $0x60] sm:$0xff]
      %v221 = vld [vmem:[%s197 + $0x68] sm:$0xff]
      %v222 = vld [vmem:[%s197 + $0x70] sm:$0x3]
      %v223 = vld [vmem:[%s197 + $0x78] sm:$0xff]
      %v224 = vld [vmem:[%s197 + $0x80] sm:$0xff]
      %v225 = vld [vmem:[%s197 + $0x88] sm:$0x3]
      %v226 = vld [vmem:[%s197 + $0x90] sm:$0xff]
      %v227 = vld [vmem:[%s197 + $0x98] sm:$0xff]
      %v228 = vld [vmem:[%s197 + $0xa0] sm:$0x3]
      %v229 = vld [vmem:[%s197 + $0xa8] sm:$0xff]
      %v230 = vld [vmem:[%s197 + $0xb0] sm:$0xff]
      %v231 = vld [vmem:[%s197 + $0xb8] sm:$0x3]
      %v232 = vld [vmem:[%s197 + $0xc0] sm:$0xff]
      %v233 = vld [vmem:[%s197 + $0xc8] sm:$0xff]
      %v234 = vld [vmem:[%s197 + $0xd0] sm:$0x3]
      %v235 = vld [vmem:[%s197 + $0xd8] sm:$0xff]
      %v236 = vld [vmem:[%s197 + $0xe0] sm:$0xff]
      %v237 = vld [vmem:[%s197 + $0xe8] sm:$0x3]
      %v238 = vld [vmem:[%s1] sm:$0xf]
      %vm263 = vcmask 1046528
      %v264 = vrot.slane %v208, 1
      %v265 = vrot.slane %v209, 1
      %v266 = vsel %vm263, %v264, %v265
      %v267 = vrot.slane %v210, 1
      %v268 = vsel %vm263, %v265, %v267
      %v269 = vrot.slane %v211, 1
      %v270 = vrot.slane %v212, 1
      %v271 = vsel %vm263, %v269, %v270
      %v272 = vrot.slane %v213, 1
      %v273 = vsel %vm263, %v270, %v272
      %v274 = vrot.slane %v214, 1
      %v275 = vrot.slane %v215, 1
      %v276 = vsel %vm263, %v274, %v275
      %v277 = vrot.slane %v216, 1
      %v278 = vsel %vm263, %v275, %v277
      %v279 = vrot.slane %v217, 1
      %v280 = vrot.slane %v218, 1
      %v281 = vsel %vm263, %v279, %v280
      %v282 = vrot.slane %v219, 1
      %v283 = vsel %vm263, %v280, %v282
      %v284 = vrot.slane %v220, 1
      %v285 = vrot.slane %v221, 1
      %v286 = vsel %vm263, %v284, %v285
      %v287 = vrot.slane %v222, 1
      %v288 = vsel %vm263, %v285, %v287
      %v289 = vrot.slane %v223, 1
      %v290 = vrot.slane %v224, 1
      %v291 = vsel %vm263, %v289, %v290
      %v292 = vrot.slane %v225, 1
      %v293 = vsel %vm263, %v290, %v292
      %v294 = vrot.slane %v226, 1
      %v295 = vrot.slane %v227, 1
      %v296 = vsel %vm263, %v294, %v295
      %v297 = vrot.slane %v228, 1
      %v298 = vsel %vm263, %v295, %v297
      %v299 = vrot.slane %v229, 1
      %v300 = vrot.slane %v230, 1
      %v301 = vsel %vm263, %v299, %v300
      %v302 = vrot.slane %v231, 1
      %v303 = vsel %vm263, %v300, %v302
      %s304 = scalar_lea.vmem %s1, 4
      %v305 = vld [vmem:[%s304] sm:$0xf]
      %vm306 = vcmask 31744
      %v307 = vsel %vm306, %v266, 0
      %v309 = vsel %vm306, %v268, 0
      %v311 = vsel %vm306, %v271, 0
      %v313 = vsel %vm306, %v273, 0
      %v315 = vsel %vm306, %v276, 0
      %v317 = vsel %vm306, %v278, 0
      %v319 = vsel %vm306, %v281, 0
      %v321 = vsel %vm306, %v283, 0
      %v323 = vsel %vm306, %v286, 0
      %v325 = vsel %vm306, %v288, 0
      %v327 = vsel %vm306, %v291, 0
      %v329 = vsel %vm306, %v293, 0
      %v331 = vsel %vm306, %v296, 0
      %v333 = vsel %vm306, %v298, 0
      %v335 = vsel %vm306, %v301, 0
      %v337 = vsel %vm306, %v303, 0
      %vm339 = vcmask 1043456
      %v341 = vsel %vm339, %v305, 0
      %343 = vmatprep.subr.mxu0 0.0
      %344 = vmatpush1.msra.mxu0 0.0
      %345 = vmatprep.subr.mxu0 0.0
      %346 = vmatpush1.msra.mxu0 0.0
      %347 = vmatprep.subr.mxu0 0.0
      %348 = vmatpush1.msra.mxu0 0.0
      %349 = vmatprep.subr.mxu0 0.0
      %350 = vmatpush1.msra.mxu0 0.0
      %351 = vmatprep.subr.mxu0 0.0
      %352 = vmatpush1.msra.mxu0 0.0
      %353 = vmatprep.subr.mxu0 0.0
      %354 = vmatpush1.msra.mxu0 0.0
      %355 = vmatprep.subr.mxu0 0.0
      %356 = vmatpush1.msra.mxu0 0.0
      %357 = vmatprep.subr.mxu0 0.0
      %358 = vmatpush1.msra.mxu0 0.0
      %359 = vmatprep.subr.mxu0 0.0
      %360 = vmatpush1.msra.mxu0 0.0
      %361 = vmatprep.subr.mxu0 0.0
      %362 = vmatpush1.msra.mxu0 0.0
      %363 = vmatprep.subr.mxu0 0.0
      %364 = vmatpush1.msra.mxu0 0.0
      %365 = vmatprep.subr.mxu0 0.0
      %366 = vmatpush1.msra.mxu0 0.0
      %367 = vmatprep.subr.mxu0 0.0
      %368 = vmatpush1.msra.mxu0 0.0
      %369 = vmatprep.subr.mxu0 0.0
      %370 = vmatpush1.msra.mxu0 0.0
      %371 = vmatprep.subr.mxu0 0.0
      %372 = vmatpush1.msra.mxu0 0.0
      %373 = vmatprep.subr.mxu0 0.0
      %374 = vmatpush1.msra.mxu0 %v341
      %375 = vmatprep.subr.mxu0 0.0
      %376 = vmatpush2.msra.mxu0 0.0
      %377 = vmatprep.subr.mxu0 0.0
      %378 = vmatpush2.msra.mxu0 0.0
      %379 = vmatprep.subr.mxu0 0.0
      %380 = vmatpush2.msra.mxu0 0.0
      %381 = vmatprep.subr.mxu0 0.0
      %382 = vmatpush2.msra.mxu0 0.0
      %383 = vmatprep.subr.mxu0 0.0
      %384 = vmatpush2.msra.mxu0 0.0
      %385 = vmatprep.subr.mxu0 0.0
      %386 = vmatpush2.msra.mxu0 0.0
      %387 = vmatprep.subr.mxu0 0.0
      %388 = vmatpush2.msra.mxu0 0.0
      %389 = vmatprep.subr.mxu0 0.0
      %390 = vmatpush2.msra.mxu0 0.0
      %391 = vmatprep.subr.mxu0 0.0
      %392 = vmatpush2.msra.mxu0 0.0
      %393 = vmatprep.subr.mxu0 0.0
      %394 = vmatpush2.msra.mxu0 0.0
      %395 = vmatprep.subr.mxu0 0.0
      %396 = vmatpush2.msra.mxu0 0.0
      %397 = vmatprep.subr.mxu0 0.0
      %398 = vmatpush2.msra.mxu0 0.0
      %399 = vmatprep.subr.mxu0 0.0
      %400 = vmatpush2.msra.mxu0 0.0
      %401 = vmatprep.subr.mxu0 0.0
      %402 = vmatpush2.msra.mxu0 0.0
      %403 = vmatprep.subr.mxu0 0.0
      %404 = vmatpush2.msra.mxu0 0.0
      %405 = vmatprep.subr.mxu0 0.0
      %406 = vmatpush2.msra.mxu0 0.0
      %407 = vmatprep.mubr.f32.mxu0 0.0
      %408 = vmatmul.mubr.f32.gmra.mxu0 %v307
      %v409 = vpop.f32.mrf.mxu0
      %v410 = vadd.f32 0.0, %v409
      %v411 = vpop.f32.mrf.mxu0
      %412 = vmatprep.mubr.f32.mxu0 0.0
      %413 = vmatmul.mubr.f32.gmra.mxu0 %v309
      %v414 = vpop.f32.mrf.mxu0
      %v415 = vadd.f32 0.0, %v414
      %v416 = vpop.f32.mrf.mxu0
      %417 = vmatprep.mubr.f32.mxu0 0.0
      %418 = vmatmul.mubr.f32.gmra.mxu0 %v311
      %v419 = vpop.f32.mrf.mxu0
      %v420 = vadd.f32 0.0, %v419
      %v421 = vpop.f32.mrf.mxu0
      %422 = vmatprep.mubr.f32.mxu0 0.0
      %423 = vmatmul.mubr.f32.gmra.mxu0 %v313
      %v424 = vpop.f32.mrf.mxu0
      %v425 = vadd.f32 0.0, %v424
      %v426 = vpop.f32.mrf.mxu0
      %427 = vmatprep.mubr.f32.mxu0 0.0
      %428 = vmatmul.mubr.f32.gmra.mxu0 %v315
      %v429 = vpop.f32.mrf.mxu0
      %v430 = vadd.f32 0.0, %v429
      %v431 = vpop.f32.mrf.mxu0
      %432 = vmatprep.mubr.f32.mxu0 0.0
      %433 = vmatmul.mubr.f32.gmra.mxu0 %v317
      %v434 = vpop.f32.mrf.mxu0
      %v435 = vadd.f32 0.0, %v434
      %v436 = vpop.f32.mrf.mxu0
      %437 = vmatprep.mubr.f32.mxu0 0.0
      %438 = vmatmul.mubr.f32.gmra.mxu0 %v319
      %v439 = vpop.f32.mrf.mxu0
      %v440 = vadd.f32 0.0, %v439
      %v441 = vpop.f32.mrf.mxu0
      %442 = vmatprep.mubr.f32.mxu0 0.0
      %443 = vmatmul.mubr.f32.gmra.mxu0 %v321
      %v444 = vpop.f32.mrf.mxu0
      %v445 = vadd.f32 0.0, %v444
      %v446 = vpop.f32.mrf.mxu0
      %447 = vmatprep.mubr.f32.mxu0 0.0
      %448 = vmatmul.mubr.f32.gmra.mxu0 %v323
      %v449 = vpop.f32.mrf.mxu0
      %v450 = vadd.f32 0.0, %v449
      %v451 = vpop.f32.mrf.mxu0
      %452 = vmatprep.mubr.f32.mxu0 0.0
      %453 = vmatmul.mubr.f32.gmra.mxu0 %v325
      %v454 = vpop.f32.mrf.mxu0
      %v455 = vadd.f32 0.0, %v454
      %v456 = vpop.f32.mrf.mxu0
      %457 = vmatprep.mubr.f32.mxu0 0.0
      %458 = vmatmul.mubr.f32.gmra.mxu0 %v327
      %v459 = vpop.f32.mrf.mxu0
      %v460 = vadd.f32 0.0, %v459
      %v461 = vpop.f32.mrf.mxu0
      %462 = vmatprep.mubr.f32.mxu0 0.0
      %463 = vmatmul.mubr.f32.gmra.mxu0 %v329
      %v464 = vpop.f32.mrf.mxu0
      %v465 = vadd.f32 0.0, %v464
      %v466 = vpop.f32.mrf.mxu0
      %467 = vmatprep.mubr.f32.mxu0 0.0
      %468 = vmatmul.mubr.f32.gmra.mxu0 %v331
      %v469 = vpop.f32.mrf.mxu0
      %v470 = vadd.f32 0.0, %v469
      %v471 = vpop.f32.mrf.mxu0
      %472 = vmatprep.mubr.f32.mxu0 0.0
      %473 = vmatmul.mubr.f32.gmra.mxu0 %v333
      %v474 = vpop.f32.mrf.mxu0
      %v475 = vadd.f32 0.0, %v474
      %v476 = vpop.f32.mrf.mxu0
      %477 = vmatprep.mubr.f32.mxu0 0.0
      %478 = vmatmul.mubr.f32.gmra.mxu0 %v335
      %v479 = vpop.f32.mrf.mxu0
      %v480 = vadd.f32 0.0, %v479
      %v481 = vpop.f32.mrf.mxu0
      %482 = vmatprep.mubr.f32.mxu0 0.0
      %483 = vmatmul.mubr.f32.gmra.mxu0 %v337
      %v484 = vpop.f32.mrf.mxu0
      %v485 = vadd.f32 0.0, %v484
      %v486 = vpop.f32.mrf.mxu0
      %487 = vdwg.mxu0
      %v488 = vsel %vm306, %v208, 0
      %v490 = vsel %vm306, %v209, 0
      %v492 = vsel %vm306, %v211, 0
      %v494 = vsel %vm306, %v212, 0
      %v496 = vsel %vm306, %v214, 0
      %v498 = vsel %vm306, %v215, 0
      %v500 = vsel %vm306, %v217, 0
      %v502 = vsel %vm306, %v218, 0
      %v504 = vsel %vm306, %v220, 0
      %v506 = vsel %vm306, %v221, 0
      %v508 = vsel %vm306, %v223, 0
      %v510 = vsel %vm306, %v224, 0
      %v512 = vsel %vm306, %v226, 0
      %v514 = vsel %vm306, %v227, 0
      %v516 = vsel %vm306, %v229, 0
      %v518 = vsel %vm306, %v230, 0
      %v521 = vsel %vm339, %v238, 0
      %523 = vmatprep.subr.mxu0 0.0
      %524 = vmatpush1.msra.mxu0 0.0
      %525 = vmatprep.subr.mxu0 0.0
      %526 = vmatpush1.msra.mxu0 0.0
      %527 = vmatprep.subr.mxu0 0.0
      %528 = vmatpush1.msra.mxu0 0.0
      %529 = vmatprep.subr.mxu0 0.0
      %530 = vmatpush1.msra.mxu0 0.0
      %531 = vmatprep.subr.mxu0 0.0
      %532 = vmatpush1.msra.mxu0 0.0
      %533 = vmatprep.subr.mxu0 0.0
      %534 = vmatpush1.msra.mxu0 0.0
      %535 = vmatprep.subr.mxu0 0.0
      %536 = vmatpush1.msra.mxu0 0.0
      %537 = vmatprep.subr.mxu0 0.0
      %538 = vmatpush1.msra.mxu0 0.0
      %539 = vmatprep.subr.mxu0 0.0
      %540 = vmatpush1.msra.mxu0 0.0
      %541 = vmatprep.subr.mxu0 0.0
      %542 = vmatpush1.msra.mxu0 0.0
      %543 = vmatprep.subr.mxu0 0.0
      %544 = vmatpush1.msra.mxu0 0.0
      %545 = vmatprep.subr.mxu0 0.0
      %546 = vmatpush1.msra.mxu0 0.0
      %547 = vmatprep.subr.mxu0 0.0
      %548 = vmatpush1.msra.mxu0 0.0
      %549 = vmatprep.subr.mxu0 0.0
      %550 = vmatpush1.msra.mxu0 0.0
      %551 = vmatprep.subr.mxu0 0.0
      %552 = vmatpush1.msra.mxu0 0.0
      %553 = vmatprep.subr.mxu0 0.0
      %554 = vmatpush1.msra.mxu0 %v521
      %555 = vmatprep.subr.mxu0 0.0
      %556 = vmatpush2.msra.mxu0 0.0
      %557 = vmatprep.subr.mxu0 0.0
      %558 = vmatpush2.msra.mxu0 0.0
      %559 = vmatprep.subr.mxu0 0.0
      %560 = vmatpush2.msra.mxu0 0.0
      %561 = vmatprep.subr.mxu0 0.0
      %562 = vmatpush2.msra.mxu0 0.0
      %563 = vmatprep.subr.mxu0 0.0
      %564 = vmatpush2.msra.mxu0 0.0
      %565 = vmatprep.subr.mxu0 0.0
      %566 = vmatpush2.msra.mxu0 0.0
      %567 = vmatprep.subr.mxu0 0.0
      %568 = vmatpush2.msra.mxu0 0.0
      %569 = vmatprep.subr.mxu0 0.0
      %570 = vmatpush2.msra.mxu0 0.0
      %571 = vmatprep.subr.mxu0 0.0
      %572 = vmatpush2.msra.mxu0 0.0
      %573 = vmatprep.subr.mxu0 0.0
      %574 = vmatpush2.msra.mxu0 0.0
      %575 = vmatprep.subr.mxu0 0.0
      %576 = vmatpush2.msra.mxu0 0.0
      %577 = vmatprep.subr.mxu0 0.0
      %578 = vmatpush2.msra.mxu0 0.0
      %579 = vmatprep.subr.mxu0 0.0
      %580 = vmatpush2.msra.mxu0 0.0
      %581 = vmatprep.subr.mxu0 0.0
      %582 = vmatpush2.msra.mxu0 0.0
      %583 = vmatprep.subr.mxu0 0.0
      %584 = vmatpush2.msra.mxu0 0.0
      %585 = vmatprep.subr.mxu0 0.0
      %586 = vmatpush2.msra.mxu0 0.0
      %587 = vmatprep.mubr.f32.mxu0 0.0
      %588 = vmatmul.mubr.f32.gmra.mxu0 %v488
      %v589 = vpop.f32.mrf.mxu0
      %v590 = vadd.f32 %v410, %v589
      %v591 = vpop.f32.mrf.mxu0
      %592 = vmatprep.mubr.f32.mxu0 0.0
      %593 = vmatmul.mubr.f32.gmra.mxu0 %v490
      %v594 = vpop.f32.mrf.mxu0
      %v595 = vadd.f32 %v415, %v594
      %v596 = vpop.f32.mrf.mxu0
      %597 = vmatprep.mubr.f32.mxu0 0.0
      %598 = vmatmul.mubr.f32.gmra.mxu0 %v492
      %v599 = vpop.f32.mrf.mxu0
      %v600 = vadd.f32 %v420, %v599
      %v601 = vpop.f32.mrf.mxu0
      %602 = vmatprep.mubr.f32.mxu0 0.0
      %603 = vmatmul.mubr.f32.gmra.mxu0 %v494
      %v604 = vpop.f32.mrf.mxu0
      %v605 = vadd.f32 %v425, %v604
      %v606 = vpop.f32.mrf.mxu0
      %607 = vmatprep.mubr.f32.mxu0 0.0
      %608 = vmatmul.mubr.f32.gmra.mxu0 %v496
      %v609 = vpop.f32.mrf.mxu0
      %v610 = vadd.f32 %v430, %v609
      %v611 = vpop.f32.mrf.mxu0
      %612 = vmatprep.mubr.f32.mxu0 0.0
      %613 = vmatmul.mubr.f32.gmra.mxu0 %v498
      %v614 = vpop.f32.mrf.mxu0
      %v615 = vadd.f32 %v435, %v614
      %v616 = vpop.f32.mrf.mxu0
      %617 = vmatprep.mubr.f32.mxu0 0.0
      %618 = vmatmul.mubr.f32.gmra.mxu0 %v500
      %v619 = vpop.f32.mrf.mxu0
      %v620 = vadd.f32 %v440, %v619
      %v621 = vpop.f32.mrf.mxu0
      %622 = vmatprep.mubr.f32.mxu0 0.0
      %623 = vmatmul.mubr.f32.gmra.mxu0 %v502
      %v624 = vpop.f32.mrf.mxu0
      %v625 = vadd.f32 %v445, %v624
      %v626 = vpop.f32.mrf.mxu0
      %627 = vmatprep.mubr.f32.mxu0 0.0
      %628 = vmatmul.mubr.f32.gmra.mxu0 %v504
      %v629 = vpop.f32.mrf.mxu0
      %v630 = vadd.f32 %v450, %v629
      %v631 = vpop.f32.mrf.mxu0
      %632 = vmatprep.mubr.f32.mxu0 0.0
      %633 = vmatmul.mubr.f32.gmra.mxu0 %v506
      %v634 = vpop.f32.mrf.mxu0
      %v635 = vadd.f32 %v455, %v634
      %v636 = vpop.f32.mrf.mxu0
      %637 = vmatprep.mubr.f32.mxu0 0.0
      %638 = vmatmul.mubr.f32.gmra.mxu0 %v508
      %v639 = vpop.f32.mrf.mxu0
      %v640 = vadd.f32 %v460, %v639
      %v641 = vpop.f32.mrf.mxu0
      %642 = vmatprep.mubr.f32.mxu0 0.0
      %643 = vmatmul.mubr.f32.gmra.mxu0 %v510
      %v644 = vpop.f32.mrf.mxu0
      %v645 = vadd.f32 %v465, %v644
      %v646 = vpop.f32.mrf.mxu0
      %647 = vmatprep.mubr.f32.mxu0 0.0
      %648 = vmatmul.mubr.f32.gmra.mxu0 %v512
      %v649 = vpop.f32.mrf.mxu0
      %v650 = vadd.f32 %v470, %v649
      %v651 = vpop.f32.mrf.mxu0
      %652 = vmatprep.mubr.f32.mxu0 0.0
      %653 = vmatmul.mubr.f32.gmra.mxu0 %v514
      %v654 = vpop.f32.mrf.mxu0
      %v655 = vadd.f32 %v475, %v654
      %v656 = vpop.f32.mrf.mxu0
      %657 = vmatprep.mubr.f32.mxu0 0.0
      %658 = vmatmul.mubr.f32.gmra.mxu0 %v516
      %v659 = vpop.f32.mrf.mxu0
      %v660 = vadd.f32 %v480, %v659
      %v661 = vpop.f32.mrf.mxu0
      %662 = vmatprep.mubr.f32.mxu0 0.0
      %663 = vmatmul.mubr.f32.gmra.mxu0 %v518
      %v664 = vpop.f32.mrf.mxu0
      %v665 = vadd.f32 %v485, %v664
      %v666 = vpop.f32.mrf.mxu0
      %667 = vdwg.mxu0
      %vm668 = vcmask 1045504
      %v669 = vrot.slane %v208, 2
      %v670 = vrot.slane %v209, 2
      %v671 = vsel %vm668, %v669, %v670
      %v672 = vrot.slane %v210, 2
      %v673 = vsel %vm668, %v670, %v672
      %v674 = vrot.slane %v211, 2
      %v675 = vrot.slane %v212, 2
      %v676 = vsel %vm668, %v674, %v675
      %v677 = vrot.slane %v213, 2
      %v678 = vsel %vm668, %v675, %v677
      %v679 = vrot.slane %v214, 2
      %v680 = vrot.slane %v215, 2
      %v681 = vsel %vm668, %v679, %v680
      %v682 = vrot.slane %v216, 2
      %v683 = vsel %vm668, %v680, %v682
      %v684 = vrot.slane %v217, 2
      %v685 = vrot.slane %v218, 2
      %v686 = vsel %vm668, %v684, %v685
      %v687 = vrot.slane %v219, 2
      %v688 = vsel %vm668, %v685, %v687
      %v689 = vrot.slane %v220, 2
      %v690 = vrot.slane %v221, 2
      %v691 = vsel %vm668, %v689, %v690
      %v692 = vrot.slane %v222, 2
      %v693 = vsel %vm668, %v690, %v692
      %v694 = vrot.slane %v223, 2
      %v695 = vrot.slane %v224, 2
      %v696 = vsel %vm668, %v694, %v695
      %v697 = vrot.slane %v225, 2
      %v698 = vsel %vm668, %v695, %v697
      %v699 = vrot.slane %v226, 2
      %v700 = vrot.slane %v227, 2
      %v701 = vsel %vm668, %v699, %v700
      %v702 = vrot.slane %v228, 2
      %v703 = vsel %vm668, %v700, %v702
      %v704 = vrot.slane %v229, 2
      %v705 = vrot.slane %v230, 2
      %v706 = vsel %vm668, %v704, %v705
      %v707 = vrot.slane %v231, 2
      %v708 = vsel %vm668, %v705, %v707
      %s709 = scalar_lea.vmem %s1, 8
      %v710 = vld [vmem:[%s709] sm:$0xf]
      %v711 = vsel %vm306, %v671, 0
      %v713 = vsel %vm306, %v673, 0
      %v715 = vsel %vm306, %v676, 0
      %v717 = vsel %vm306, %v678, 0
      %v719 = vsel %vm306, %v681, 0
      %v721 = vsel %vm306, %v683, 0
      %v723 = vsel %vm306, %v686, 0
      %v725 = vsel %vm306, %v688, 0
      %v727 = vsel %vm306, %v691, 0
      %v729 = vsel %vm306, %v693, 0
      %v731 = vsel %vm306, %v696, 0
      %v733 = vsel %vm306, %v698, 0
      %v735 = vsel %vm306, %v701, 0
      %v737 = vsel %vm306, %v703, 0
      %v739 = vsel %vm306, %v706, 0
      %v741 = vsel %vm306, %v708, 0
      %v744 = vsel %vm339, %v710, 0
      %746 = vmatprep.subr.mxu0 0.0
      %747 = vmatpush1.msra.mxu0 0.0
      %748 = vmatprep.subr.mxu0 0.0
      %749 = vmatpush1.msra.mxu0 0.0
      %750 = vmatprep.subr.mxu0 0.0
      %751 = vmatpush1.msra.mxu0 0.0
      %752 = vmatprep.subr.mxu0 0.0
      %753 = vmatpush1.msra.mxu0 0.0
      %754 = vmatprep.subr.mxu0 0.0
      %755 = vmatpush1.msra.mxu0 0.0
      %756 = vmatprep.subr.mxu0 0.0
      %757 = vmatpush1.msra.mxu0 0.0
      %758 = vmatprep.subr.mxu0 0.0
      %759 = vmatpush1.msra.mxu0 0.0
      %760 = vmatprep.subr.mxu0 0.0
      %761 = vmatpush1.msra.mxu0 0.0
      %762 = vmatprep.subr.mxu0 0.0
      %763 = vmatpush1.msra.mxu0 0.0
      %764 = vmatprep.subr.mxu0 0.0
      %765 = vmatpush1.msra.mxu0 0.0
      %766 = vmatprep.subr.mxu0 0.0
      %767 = vmatpush1.msra.mxu0 0.0
      %768 = vmatprep.subr.mxu0 0.0
      %769 = vmatpush1.msra.mxu0 0.0
      %770 = vmatprep.subr.mxu0 0.0
      %771 = vmatpush1.msra.mxu0 0.0
      %772 = vmatprep.subr.mxu0 0.0
      %773 = vmatpush1.msra.mxu0 0.0
      %774 = vmatprep.subr.mxu0 0.0
      %775 = vmatpush1.msra.mxu0 0.0
      %776 = vmatprep.subr.mxu0 0.0
      %777 = vmatpush1.msra.mxu0 %v744
      %778 = vmatprep.subr.mxu0 0.0
      %779 = vmatpush2.msra.mxu0 0.0
      %780 = vmatprep.subr.mxu0 0.0
      %781 = vmatpush2.msra.mxu0 0.0
      %782 = vmatprep.subr.mxu0 0.0
      %783 = vmatpush2.msra.mxu0 0.0
      %784 = vmatprep.subr.mxu0 0.0
      %785 = vmatpush2.msra.mxu0 0.0
      %786 = vmatprep.subr.mxu0 0.0
      %787 = vmatpush2.msra.mxu0 0.0
      %788 = vmatprep.subr.mxu0 0.0
      %789 = vmatpush2.msra.mxu0 0.0
      %790 = vmatprep.subr.mxu0 0.0
      %791 = vmatpush2.msra.mxu0 0.0
      %792 = vmatprep.subr.mxu0 0.0
      %793 = vmatpush2.msra.mxu0 0.0
      %794 = vmatprep.subr.mxu0 0.0
      %795 = vmatpush2.msra.mxu0 0.0
      %796 = vmatprep.subr.mxu0 0.0
      %797 = vmatpush2.msra.mxu0 0.0
      %798 = vmatprep.subr.mxu0 0.0
      %799 = vmatpush2.msra.mxu0 0.0
      %800 = vmatprep.subr.mxu0 0.0
      %801 = vmatpush2.msra.mxu0 0.0
      %802 = vmatprep.subr.mxu0 0.0
      %803 = vmatpush2.msra.mxu0 0.0
      %804 = vmatprep.subr.mxu0 0.0
      %805 = vmatpush2.msra.mxu0 0.0
      %806 = vmatprep.subr.mxu0 0.0
      %807 = vmatpush2.msra.mxu0 0.0
      %808 = vmatprep.subr.mxu0 0.0
      %809 = vmatpush2.msra.mxu0 0.0
      %810 = vmatprep.mubr.f32.mxu0 0.0
      %811 = vmatmul.mubr.f32.gmra.mxu0 %v711
      %v812 = vpop.f32.mrf.mxu0
      %v813 = vadd.f32 0.0, %v812
      %v814 = vpop.f32.mrf.mxu0
      %815 = vmatprep.mubr.f32.mxu0 0.0
      %816 = vmatmul.mubr.f32.gmra.mxu0 %v713
      %v817 = vpop.f32.mrf.mxu0
      %v818 = vadd.f32 0.0, %v817
      %v819 = vpop.f32.mrf.mxu0
      %820 = vmatprep.mubr.f32.mxu0 0.0
      %821 = vmatmul.mubr.f32.gmra.mxu0 %v715
      %v822 = vpop.f32.mrf.mxu0
      %v823 = vadd.f32 0.0, %v822
      %v824 = vpop.f32.mrf.mxu0
      %825 = vmatprep.mubr.f32.mxu0 0.0
      %826 = vmatmul.mubr.f32.gmra.mxu0 %v717
      %v827 = vpop.f32.mrf.mxu0
      %v828 = vadd.f32 0.0, %v827
      %v829 = vpop.f32.mrf.mxu0
      %830 = vmatprep.mubr.f32.mxu0 0.0
      %831 = vmatmul.mubr.f32.gmra.mxu0 %v719
      %v832 = vpop.f32.mrf.mxu0
      %v833 = vadd.f32 0.0, %v832
      %v834 = vpop.f32.mrf.mxu0
      %835 = vmatprep.mubr.f32.mxu0 0.0
      %836 = vmatmul.mubr.f32.gmra.mxu0 %v721
      %v837 = vpop.f32.mrf.mxu0
      %v838 = vadd.f32 0.0, %v837
      %v839 = vpop.f32.mrf.mxu0
      %840 = vmatprep.mubr.f32.mxu0 0.0
      %841 = vmatmul.mubr.f32.gmra.mxu0 %v723
      %v842 = vpop.f32.mrf.mxu0
      %v843 = vadd.f32 0.0, %v842
      %v844 = vpop.f32.mrf.mxu0
      %845 = vmatprep.mubr.f32.mxu0 0.0
      %846 = vmatmul.mubr.f32.gmra.mxu0 %v725
      %v847 = vpop.f32.mrf.mxu0
      %v848 = vadd.f32 0.0, %v847
      %v849 = vpop.f32.mrf.mxu0
      %850 = vmatprep.mubr.f32.mxu0 0.0
      %851 = vmatmul.mubr.f32.gmra.mxu0 %v727
      %v852 = vpop.f32.mrf.mxu0
      %v853 = vadd.f32 0.0, %v852
      %v854 = vpop.f32.mrf.mxu0
      %855 = vmatprep.mubr.f32.mxu0 0.0
      %856 = vmatmul.mubr.f32.gmra.mxu0 %v729
      %v857 = vpop.f32.mrf.mxu0
      %v858 = vadd.f32 0.0, %v857
      %v859 = vpop.f32.mrf.mxu0
      %860 = vmatprep.mubr.f32.mxu0 0.0
      %861 = vmatmul.mubr.f32.gmra.mxu0 %v731
      %v862 = vpop.f32.mrf.mxu0
      %v863 = vadd.f32 0.0, %v862
      %v864 = vpop.f32.mrf.mxu0
      %865 = vmatprep.mubr.f32.mxu0 0.0
      %866 = vmatmul.mubr.f32.gmra.mxu0 %v733
      %v867 = vpop.f32.mrf.mxu0
      %v868 = vadd.f32 0.0, %v867
      %v869 = vpop.f32.mrf.mxu0
      %870 = vmatprep.mubr.f32.mxu0 0.0
      %871 = vmatmul.mubr.f32.gmra.mxu0 %v735
      %v872 = vpop.f32.mrf.mxu0
      %v873 = vadd.f32 0.0, %v872
      %v874 = vpop.f32.mrf.mxu0
      %875 = vmatprep.mubr.f32.mxu0 0.0
      %876 = vmatmul.mubr.f32.gmra.mxu0 %v737
      %v877 = vpop.f32.mrf.mxu0
      %v878 = vadd.f32 0.0, %v877
      %v879 = vpop.f32.mrf.mxu0
      %880 = vmatprep.mubr.f32.mxu0 0.0
      %881 = vmatmul.mubr.f32.gmra.mxu0 %v739
      %v882 = vpop.f32.mrf.mxu0
      %v883 = vadd.f32 0.0, %v882
      %v884 = vpop.f32.mrf.mxu0
      %885 = vmatprep.mubr.f32.mxu0 0.0
      %886 = vmatmul.mubr.f32.gmra.mxu0 %v741
      %v887 = vpop.f32.mrf.mxu0
      %v888 = vadd.f32 0.0, %v887
      %v889 = vpop.f32.mrf.mxu0
      %890 = vdwg.mxu0
      %v891 = vadd.f32 %v590, %v813
      %v892 = vadd.f32 %v595, %v818
      %v893 = vadd.f32 %v600, %v823
      %v894 = vadd.f32 %v605, %v828
      %v895 = vadd.f32 %v610, %v833
      %v896 = vadd.f32 %v615, %v838
      %v897 = vadd.f32 %v620, %v843
      %v898 = vadd.f32 %v625, %v848
      %v899 = vadd.f32 %v630, %v853
      %v900 = vadd.f32 %v635, %v858
      %v901 = vadd.f32 %v640, %v863
      %v902 = vadd.f32 %v645, %v868
      %v903 = vadd.f32 %v650, %v873
      %v904 = vadd.f32 %v655, %v878
      %v905 = vadd.f32 %v660, %v883
      %v906 = vadd.f32 %v665, %v888
      %s907 = scalar_lea.vmem %s1, 12
      %v908 = vld [vmem:[%s907] sm:$0xf]
      %v910 = vsel %vm306, %v232, 0
      %v913 = vsel %vm306, %v233, 0
      %v916 = vsel %vm339, %v908, 0
      %918 = vmatprep.subr.mxu0 0.0
      %919 = vmatpush1.msra.mxu0 0.0
      %920 = vmatprep.subr.mxu0 0.0
      %921 = vmatpush1.msra.mxu0 0.0
      %922 = vmatprep.subr.mxu0 0.0
      %923 = vmatpush1.msra.mxu0 0.0
      %924 = vmatprep.subr.mxu0 0.0
      %925 = vmatpush1.msra.mxu0 0.0
      %926 = vmatprep.subr.mxu0 0.0
      %927 = vmatpush1.msra.mxu0 0.0
      %928 = vmatprep.subr.mxu0 0.0
      %929 = vmatpush1.msra.mxu0 0.0
      %930 = vmatprep.subr.mxu0 0.0
      %931 = vmatpush1.msra.mxu0 0.0
      %932 = vmatprep.subr.mxu0 0.0
      %933 = vmatpush1.msra.mxu0 0.0
      %934 = vmatprep.subr.mxu0 0.0
      %935 = vmatpush1.msra.mxu0 0.0
      %936 = vmatprep.subr.mxu0 0.0
      %937 = vmatpush1.msra.mxu0 0.0
      %938 = vmatprep.subr.mxu0 0.0
      %939 = vmatpush1.msra.mxu0 0.0
      %940 = vmatprep.subr.mxu0 0.0
      %941 = vmatpush1.msra.mxu0 0.0
      %942 = vmatprep.subr.mxu0 0.0
      %943 = vmatpush1.msra.mxu0 0.0
      %944 = vmatprep.subr.mxu0 0.0
      %945 = vmatpush1.msra.mxu0 0.0
      %946 = vmatprep.subr.mxu0 0.0
      %947 = vmatpush1.msra.mxu0 0.0
      %948 = vmatprep.subr.mxu0 0.0
      %949 = vmatpush1.msra.mxu0 %v916
      %950 = vmatprep.subr.mxu0 0.0
      %951 = vmatpush2.msra.mxu0 0.0
      %952 = vmatprep.subr.mxu0 0.0
      %953 = vmatpush2.msra.mxu0 0.0
      %954 = vmatprep.subr.mxu0 0.0
      %955 = vmatpush2.msra.mxu0 0.0
      %956 = vmatprep.subr.mxu0 0.0
      %957 = vmatpush2.msra.mxu0 0.0
      %958 = vmatprep.subr.mxu0 0.0
      %959 = vmatpush2.msra.mxu0 0.0
      %960 = vmatprep.subr.mxu0 0.0
      %961 = vmatpush2.msra.mxu0 0.0
      %962 = vmatprep.subr.mxu0 0.0
      %963 = vmatpush2.msra.mxu0 0.0
      %964 = vmatprep.subr.mxu0 0.0
      %965 = vmatpush2.msra.mxu0 0.0
      %966 = vmatprep.subr.mxu0 0.0
      %967 = vmatpush2.msra.mxu0 0.0
      %968 = vmatprep.subr.mxu0 0.0
      %969 = vmatpush2.msra.mxu0 0.0
      %970 = vmatprep.subr.mxu0 0.0
      %971 = vmatpush2.msra.mxu0 0.0
      %972 = vmatprep.subr.mxu0 0.0
      %973 = vmatpush2.msra.mxu0 0.0
      %974 = vmatprep.subr.mxu0 0.0
      %975 = vmatpush2.msra.mxu0 0.0
      %976 = vmatprep.subr.mxu0 0.0
      %977 = vmatpush2.msra.mxu0 0.0
      %978 = vmatprep.subr.mxu0 0.0
      %979 = vmatpush2.msra.mxu0 0.0
      %980 = vmatprep.subr.mxu0 0.0
      %981 = vmatpush2.msra.mxu0 0.0
      %982 = vmatprep.mubr.f32.mxu0 0.0
      %983 = vmatmul.mubr.f32.gmra.mxu0 %v492
      %v984 = vpop.f32.mrf.mxu0
      %v985 = vadd.f32 0.0, %v984
      %v986 = vpop.f32.mrf.mxu0
      %987 = vmatprep.mubr.f32.mxu0 0.0
      %988 = vmatmul.mubr.f32.gmra.mxu0 %v494
      %v989 = vpop.f32.mrf.mxu0
      %v990 = vadd.f32 0.0, %v989
      %v991 = vpop.f32.mrf.mxu0
      %992 = vmatprep.mubr.f32.mxu0 0.0
      %993 = vmatmul.mubr.f32.gmra.mxu0 %v496
      %v994 = vpop.f32.mrf.mxu0
      %v995 = vadd.f32 0.0, %v994
      %v996 = vpop.f32.mrf.mxu0
      %997 = vmatprep.mubr.f32.mxu0 0.0
      %998 = vmatmul.mubr.f32.gmra.mxu0 %v498
      %v999 = vpop.f32.mrf.mxu0
      %v1000 = vadd.f32 0.0, %v999
      %v1001 = vpop.f32.mrf.mxu0
      %1002 = vmatprep.mubr.f32.mxu0 0.0
      %1003 = vmatmul.mubr.f32.gmra.mxu0 %v500
      %v1004 = vpop.f32.mrf.mxu0
      %v1005 = vadd.f32 0.0, %v1004
      %v1006 = vpop.f32.mrf.mxu0
      %1007 = vmatprep.mubr.f32.mxu0 0.0
      %1008 = vmatmul.mubr.f32.gmra.mxu0 %v502
      %v1009 = vpop.f32.mrf.mxu0
      %v1010 = vadd.f32 0.0, %v1009
      %v1011 = vpop.f32.mrf.mxu0
      %1012 = vmatprep.mubr.f32.mxu0 0.0
      %1013 = vmatmul.mubr.f32.gmra.mxu0 %v504
      %v1014 = vpop.f32.mrf.mxu0
      %v1015 = vadd.f32 0.0, %v1014
      %v1016 = vpop.f32.mrf.mxu0
      %1017 = vmatprep.mubr.f32.mxu0 0.0
      %1018 = vmatmul.mubr.f32.gmra.mxu0 %v506
      %v1019 = vpop.f32.mrf.mxu0
      %v1020 = vadd.f32 0.0, %v1019
      %v1021 = vpop.f32.mrf.mxu0
      %1022 = vmatprep.mubr.f32.mxu0 0.0
      %1023 = vmatmul.mubr.f32.gmra.mxu0 %v508
      %v1024 = vpop.f32.mrf.mxu0
      %v1025 = vadd.f32 0.0, %v1024
      %v1026 = vpop.f32.mrf.mxu0
      %1027 = vmatprep.mubr.f32.mxu0 0.0
      %1028 = vmatmul.mubr.f32.gmra.mxu0 %v510
      %v1029 = vpop.f32.mrf.mxu0
      %v1030 = vadd.f32 0.0, %v1029
      %v1031 = vpop.f32.mrf.mxu0
      %1032 = vmatprep.mubr.f32.mxu0 0.0
      %1033 = vmatmul.mubr.f32.gmra.mxu0 %v512
      %v1034 = vpop.f32.mrf.mxu0
      %v1035 = vadd.f32 0.0, %v1034
      %v1036 = vpop.f32.mrf.mxu0
      %1037 = vmatprep.mubr.f32.mxu0 0.0
      %1038 = vmatmul.mubr.f32.gmra.mxu0 %v514
      %v1039 = vpop.f32.mrf.mxu0
      %v1040 = vadd.f32 0.0, %v1039
      %v1041 = vpop.f32.mrf.mxu0
      %1042 = vmatprep.mubr.f32.mxu0 0.0
      %1043 = vmatmul.mubr.f32.gmra.mxu0 %v516
      %v1044 = vpop.f32.mrf.mxu0
      %v1045 = vadd.f32 0.0, %v1044
      %v1046 = vpop.f32.mrf.mxu0
      %1047 = vmatprep.mubr.f32.mxu0 0.0
      %1048 = vmatmul.mubr.f32.gmra.mxu0 %v518
      %v1049 = vpop.f32.mrf.mxu0
      %v1050 = vadd.f32 0.0, %v1049
      %v1051 = vpop.f32.mrf.mxu0
      %1052 = vmatprep.mubr.f32.mxu0 0.0
      %1053 = vmatmul.mubr.f32.gmra.mxu0 %v910
      %v1054 = vpop.f32.mrf.mxu0
      %v1055 = vadd.f32 0.0, %v1054
      %v1056 = vpop.f32.mrf.mxu0
      %1057 = vmatprep.mubr.f32.mxu0 0.0
      %1058 = vmatmul.mubr.f32.gmra.mxu0 %v913
      %v1059 = vpop.f32.mrf.mxu0
      %v1060 = vadd.f32 0.0, %v1059
      %v1061 = vpop.f32.mrf.mxu0
      %1062 = vdwg.mxu0
      %v1063 = vadd.f32 %v891, %v985
      %v1064 = vadd.f32 %v892, %v990
      %v1065 = vadd.f32 %v893, %v995
      %v1066 = vadd.f32 %v894, %v1000
      %v1067 = vadd.f32 %v895, %v1005
      %v1068 = vadd.f32 %v896, %v1010
      %v1069 = vadd.f32 %v897, %v1015
      %v1070 = vadd.f32 %v898, %v1020
      %v1071 = vadd.f32 %v899, %v1025
      %v1072 = vadd.f32 %v900, %v1030
      %v1073 = vadd.f32 %v901, %v1035
      %v1074 = vadd.f32 %v902, %v1040
      %v1075 = vadd.f32 %v903, %v1045
      %v1076 = vadd.f32 %v904, %v1050
      %v1077 = vadd.f32 %v905, %v1055
      %v1078 = vadd.f32 %v906, %v1060
      %v1080 = vrot.slane %v232, 1
      %v1081 = vrot.slane %v233, 1
      %v1082 = vsel %vm263, %v1080, %v1081
      %v1083 = vrot.slane %v234, 1
      %v1084 = vsel %vm263, %v1081, %v1083
      %s1101 = scalar_lea.vmem %s1, 16
      %v1102 = vld [vmem:[%s1101] sm:$0xf]
      %v1103 = vsel %vm306, %v1082, 0
      %v1105 = vsel %vm306, %v1084, 0
      %v1108 = vsel %vm339, %v1102, 0
      %1110 = vmatprep.subr.mxu0 0.0
      %1111 = vmatpush1.msra.mxu0 0.0
      %1112 = vmatprep.subr.mxu0 0.0
      %1113 = vmatpush1.msra.mxu0 0.0
      %1114 = vmatprep.subr.mxu0 0.0
      %1115 = vmatpush1.msra.mxu0 0.0
      %1116 = vmatprep.subr.mxu0 0.0
      %1117 = vmatpush1.msra.mxu0 0.0
      %1118 = vmatprep.subr.mxu0 0.0
      %1119 = vmatpush1.msra.mxu0 0.0
      %1120 = vmatprep.subr.mxu0 0.0
      %1121 = vmatpush1.msra.mxu0 0.0
      %1122 = vmatprep.subr.mxu0 0.0
      %1123 = vmatpush1.msra.mxu0 0.0
      %1124 = vmatprep.subr.mxu0 0.0
      %1125 = vmatpush1.msra.mxu0 0.0
      %1126 = vmatprep.subr.mxu0 0.0
      %1127 = vmatpush1.msra.mxu0 0.0
      %1128 = vmatprep.subr.mxu0 0.0
      %1129 = vmatpush1.msra.mxu0 0.0
      %1130 = vmatprep.subr.mxu0 0.0
      %1131 = vmatpush1.msra.mxu0 0.0
      %1132 = vmatprep.subr.mxu0 0.0
      %1133 = vmatpush1.msra.mxu0 0.0
      %1134 = vmatprep.subr.mxu0 0.0
      %1135 = vmatpush1.msra.mxu0 0.0
      %1136 = vmatprep.subr.mxu0 0.0
      %1137 = vmatpush1.msra.mxu0 0.0
      %1138 = vmatprep.subr.mxu0 0.0
      %1139 = vmatpush1.msra.mxu0 0.0
      %1140 = vmatprep.subr.mxu0 0.0
      %1141 = vmatpush1.msra.mxu0 %v1108
      %1142 = vmatprep.subr.mxu0 0.0
      %1143 = vmatpush2.msra.mxu0 0.0
      %1144 = vmatprep.subr.mxu0 0.0
      %1145 = vmatpush2.msra.mxu0 0.0
      %1146 = vmatprep.subr.mxu0 0.0
      %1147 = vmatpush2.msra.mxu0 0.0
      %1148 = vmatprep.subr.mxu0 0.0
      %1149 = vmatpush2.msra.mxu0 0.0
      %1150 = vmatprep.subr.mxu0 0.0
      %1151 = vmatpush2.msra.mxu0 0.0
      %1152 = vmatprep.subr.mxu0 0.0
      %1153 = vmatpush2.msra.mxu0 0.0
      %1154 = vmatprep.subr.mxu0 0.0
      %1155 = vmatpush2.msra.mxu0 0.0
      %1156 = vmatprep.subr.mxu0 0.0
      %1157 = vmatpush2.msra.mxu0 0.0
      %1158 = vmatprep.subr.mxu0 0.0
      %1159 = vmatpush2.msra.mxu0 0.0
      %1160 = vmatprep.subr.mxu0 0.0
      %1161 = vmatpush2.msra.mxu0 0.0
      %1162 = vmatprep.subr.mxu0 0.0
      %1163 = vmatpush2.msra.mxu0 0.0
      %1164 = vmatprep.subr.mxu0 0.0
      %1165 = vmatpush2.msra.mxu0 0.0
      %1166 = vmatprep.subr.mxu0 0.0
      %1167 = vmatpush2.msra.mxu0 0.0
      %1168 = vmatprep.subr.mxu0 0.0
      %1169 = vmatpush2.msra.mxu0 0.0
      %1170 = vmatprep.subr.mxu0 0.0
      %1171 = vmatpush2.msra.mxu0 0.0
      %1172 = vmatprep.subr.mxu0 0.0
      %1173 = vmatpush2.msra.mxu0 0.0
      %1174 = vmatprep.mubr.f32.mxu0 0.0
      %1175 = vmatmul.mubr.f32.gmra.mxu0 %v311
      %v1176 = vpop.f32.mrf.mxu0
      %v1177 = vadd.f32 0.0, %v1176
      %v1178 = vpop.f32.mrf.mxu0
      %1179 = vmatprep.mubr.f32.mxu0 0.0
      %1180 = vmatmul.mubr.f32.gmra.mxu0 %v313
      %v1181 = vpop.f32.mrf.mxu0
      %v1182 = vadd.f32 0.0, %v1181
      %v1183 = vpop.f32.mrf.mxu0
      %1184 = vmatprep.mubr.f32.mxu0 0.0
      %1185 = vmatmul.mubr.f32.gmra.mxu0 %v315
      %v1186 = vpop.f32.mrf.mxu0
      %v1187 = vadd.f32 0.0, %v1186
      %v1188 = vpop.f32.mrf.mxu0
      %1189 = vmatprep.mubr.f32.mxu0 0.0
      %1190 = vmatmul.mubr.f32.gmra.mxu0 %v317
      %v1191 = vpop.f32.mrf.mxu0
      %v1192 = vadd.f32 0.0, %v1191
      %v1193 = vpop.f32.mrf.mxu0
      %1194 = vmatprep.mubr.f32.mxu0 0.0
      %1195 = vmatmul.mubr.f32.gmra.mxu0 %v319
      %v1196 = vpop.f32.mrf.mxu0
      %v1197 = vadd.f32 0.0, %v1196
      %v1198 = vpop.f32.mrf.mxu0
      %1199 = vmatprep.mubr.f32.mxu0 0.0
      %1200 = vmatmul.mubr.f32.gmra.mxu0 %v321
      %v1201 = vpop.f32.mrf.mxu0
      %v1202 = vadd.f32 0.0, %v1201
      %v1203 = vpop.f32.mrf.mxu0
      %1204 = vmatprep.mubr.f32.mxu0 0.0
      %1205 = vmatmul.mubr.f32.gmra.mxu0 %v323
      %v1206 = vpop.f32.mrf.mxu0
      %v1207 = vadd.f32 0.0, %v1206
      %v1208 = vpop.f32.mrf.mxu0
      %1209 = vmatprep.mubr.f32.mxu0 0.0
      %1210 = vmatmul.mubr.f32.gmra.mxu0 %v325
      %v1211 = vpop.f32.mrf.mxu0
      %v1212 = vadd.f32 0.0, %v1211
      %v1213 = vpop.f32.mrf.mxu0
      %1214 = vmatprep.mubr.f32.mxu0 0.0
      %1215 = vmatmul.mubr.f32.gmra.mxu0 %v327
      %v1216 = vpop.f32.mrf.mxu0
      %v1217 = vadd.f32 0.0, %v1216
      %v1218 = vpop.f32.mrf.mxu0
      %1219 = vmatprep.mubr.f32.mxu0 0.0
      %1220 = vmatmul.mubr.f32.gmra.mxu0 %v329
      %v1221 = vpop.f32.mrf.mxu0
      %v1222 = vadd.f32 0.0, %v1221
      %v1223 = vpop.f32.mrf.mxu0
      %1224 = vmatprep.mubr.f32.mxu0 0.0
      %1225 = vmatmul.mubr.f32.gmra.mxu0 %v331
      %v1226 = vpop.f32.mrf.mxu0
      %v1227 = vadd.f32 0.0, %v1226
      %v1228 = vpop.f32.mrf.mxu0
      %1229 = vmatprep.mubr.f32.mxu0 0.0
      %1230 = vmatmul.mubr.f32.gmra.mxu0 %v333
      %v1231 = vpop.f32.mrf.mxu0
      %v1232 = vadd.f32 0.0, %v1231
      %v1233 = vpop.f32.mrf.mxu0
      %1234 = vmatprep.mubr.f32.mxu0 0.0
      %1235 = vmatmul.mubr.f32.gmra.mxu0 %v335
      %v1236 = vpop.f32.mrf.mxu0
      %v1237 = vadd.f32 0.0, %v1236
      %v1238 = vpop.f32.mrf.mxu0
      %1239 = vmatprep.mubr.f32.mxu0 0.0
      %1240 = vmatmul.mubr.f32.gmra.mxu0 %v337
      %v1241 = vpop.f32.mrf.mxu0
      %v1242 = vadd.f32 0.0, %v1241
      %v1243 = vpop.f32.mrf.mxu0
      %1244 = vmatprep.mubr.f32.mxu0 0.0
      %1245 = vmatmul.mubr.f32.gmra.mxu0 %v1103
      %v1246 = vpop.f32.mrf.mxu0
      %v1247 = vadd.f32 0.0, %v1246
      %v1248 = vpop.f32.mrf.mxu0
      %1249 = vmatprep.mubr.f32.mxu0 0.0
      %1250 = vmatmul.mubr.f32.gmra.mxu0 %v1105
      %v1251 = vpop.f32.mrf.mxu0
      %v1252 = vadd.f32 0.0, %v1251
      %v1253 = vpop.f32.mrf.mxu0
      %1254 = vdwg.mxu0
      %v1255 = vadd.f32 %v1063, %v1177
      %v1256 = vadd.f32 %v1064, %v1182
      %v1257 = vadd.f32 %v1065, %v1187
      %v1258 = vadd.f32 %v1066, %v1192
      %v1259 = vadd.f32 %v1067, %v1197
      %v1260 = vadd.f32 %v1068, %v1202
      %v1261 = vadd.f32 %v1069, %v1207
      %v1262 = vadd.f32 %v1070, %v1212
      %v1263 = vadd.f32 %v1071, %v1217
      %v1264 = vadd.f32 %v1072, %v1222
      %v1265 = vadd.f32 %v1073, %v1227
      %v1266 = vadd.f32 %v1074, %v1232
      %v1267 = vadd.f32 %v1075, %v1237
      %v1268 = vadd.f32 %v1076, %v1242
      %v1269 = vadd.f32 %v1077, %v1247
      %v1270 = vadd.f32 %v1078, %v1252
      %v1271 = vrot.slane %v232, 2
      %v1272 = vrot.slane %v233, 2
      %v1273 = vsel %vm668, %v1271, %v1272
      %v1274 = vrot.slane %v234, 2
      %v1275 = vsel %vm668, %v1272, %v1274
      %s1276 = scalar_lea.vmem %s1, 20
      %v1277 = vld [vmem:[%s1276] sm:$0xf]
      %v1278 = vsel %vm306, %v1273, 0
      %v1280 = vsel %vm306, %v1275, 0
      %v1283 = vsel %vm339, %v1277, 0
      %1285 = vmatprep.subr.mxu0 0.0
      %1286 = vmatpush1.msra.mxu0 0.0
      %1287 = vmatprep.subr.mxu0 0.0
      %1288 = vmatpush1.msra.mxu0 0.0
      %1289 = vmatprep.subr.mxu0 0.0
      %1290 = vmatpush1.msra.mxu0 0.0
      %1291 = vmatprep.subr.mxu0 0.0
      %1292 = vmatpush1.msra.mxu0 0.0
      %1293 = vmatprep.subr.mxu0 0.0
      %1294 = vmatpush1.msra.mxu0 0.0
      %1295 = vmatprep.subr.mxu0 0.0
      %1296 = vmatpush1.msra.mxu0 0.0
      %1297 = vmatprep.subr.mxu0 0.0
      %1298 = vmatpush1.msra.mxu0 0.0
      %1299 = vmatprep.subr.mxu0 0.0
      %1300 = vmatpush1.msra.mxu0 0.0
      %1301 = vmatprep.subr.mxu0 0.0
      %1302 = vmatpush1.msra.mxu0 0.0
      %1303 = vmatprep.subr.mxu0 0.0
      %1304 = vmatpush1.msra.mxu0 0.0
      %1305 = vmatprep.subr.mxu0 0.0
      %1306 = vmatpush1.msra.mxu0 0.0
      %1307 = vmatprep.subr.mxu0 0.0
      %1308 = vmatpush1.msra.mxu0 0.0
      %1309 = vmatprep.subr.mxu0 0.0
      %1310 = vmatpush1.msra.mxu0 0.0
      %1311 = vmatprep.subr.mxu0 0.0
      %1312 = vmatpush1.msra.mxu0 0.0
      %1313 = vmatprep.subr.mxu0 0.0
      %1314 = vmatpush1.msra.mxu0 0.0
      %1315 = vmatprep.subr.mxu0 0.0
      %1316 = vmatpush1.msra.mxu0 %v1283
      %1317 = vmatprep.subr.mxu0 0.0
      %1318 = vmatpush2.msra.mxu0 0.0
      %1319 = vmatprep.subr.mxu0 0.0
      %1320 = vmatpush2.msra.mxu0 0.0
      %1321 = vmatprep.subr.mxu0 0.0
      %1322 = vmatpush2.msra.mxu0 0.0
      %1323 = vmatprep.subr.mxu0 0.0
      %1324 = vmatpush2.msra.mxu0 0.0
      %1325 = vmatprep.subr.mxu0 0.0
      %1326 = vmatpush2.msra.mxu0 0.0
      %1327 = vmatprep.subr.mxu0 0.0
      %1328 = vmatpush2.msra.mxu0 0.0
      %1329 = vmatprep.subr.mxu0 0.0
      %1330 = vmatpush2.msra.mxu0 0.0
      %1331 = vmatprep.subr.mxu0 0.0
      %1332 = vmatpush2.msra.mxu0 0.0
      %1333 = vmatprep.subr.mxu0 0.0
      %1334 = vmatpush2.msra.mxu0 0.0
      %1335 = vmatprep.subr.mxu0 0.0
      %1336 = vmatpush2.msra.mxu0 0.0
      %1337 = vmatprep.subr.mxu0 0.0
      %1338 = vmatpush2.msra.mxu0 0.0
      %1339 = vmatprep.subr.mxu0 0.0
      %1340 = vmatpush2.msra.mxu0 0.0
      %1341 = vmatprep.subr.mxu0 0.0
      %1342 = vmatpush2.msra.mxu0 0.0
      %1343 = vmatprep.subr.mxu0 0.0
      %1344 = vmatpush2.msra.mxu0 0.0
      %1345 = vmatprep.subr.mxu0 0.0
      %1346 = vmatpush2.msra.mxu0 0.0
      %1347 = vmatprep.subr.mxu0 0.0
      %1348 = vmatpush2.msra.mxu0 0.0
      %1349 = vmatprep.mubr.f32.mxu0 0.0
      %1350 = vmatmul.mubr.f32.gmra.mxu0 %v715
      %v1351 = vpop.f32.mrf.mxu0
      %v1352 = vadd.f32 0.0, %v1351
      %v1353 = vpop.f32.mrf.mxu0
      %1354 = vmatprep.mubr.f32.mxu0 0.0
      %1355 = vmatmul.mubr.f32.gmra.mxu0 %v717
      %v1356 = vpop.f32.mrf.mxu0
      %v1357 = vadd.f32 0.0, %v1356
      %v1358 = vpop.f32.mrf.mxu0
      %1359 = vmatprep.mubr.f32.mxu0 0.0
      %1360 = vmatmul.mubr.f32.gmra.mxu0 %v719
      %v1361 = vpop.f32.mrf.mxu0
      %v1362 = vadd.f32 0.0, %v1361
      %v1363 = vpop.f32.mrf.mxu0
      %1364 = vmatprep.mubr.f32.mxu0 0.0
      %1365 = vmatmul.mubr.f32.gmra.mxu0 %v721
      %v1366 = vpop.f32.mrf.mxu0
      %v1367 = vadd.f32 0.0, %v1366
      %v1368 = vpop.f32.mrf.mxu0
      %1369 = vmatprep.mubr.f32.mxu0 0.0
      %1370 = vmatmul.mubr.f32.gmra.mxu0 %v723
      %v1371 = vpop.f32.mrf.mxu0
      %v1372 = vadd.f32 0.0, %v1371
      %v1373 = vpop.f32.mrf.mxu0
      %1374 = vmatprep.mubr.f32.mxu0 0.0
      %1375 = vmatmul.mubr.f32.gmra.mxu0 %v725
      %v1376 = vpop.f32.mrf.mxu0
      %v1377 = vadd.f32 0.0, %v1376
      %v1378 = vpop.f32.mrf.mxu0
      %1379 = vmatprep.mubr.f32.mxu0 0.0
      %1380 = vmatmul.mubr.f32.gmra.mxu0 %v727
      %v1381 = vpop.f32.mrf.mxu0
      %v1382 = vadd.f32 0.0, %v1381
      %v1383 = vpop.f32.mrf.mxu0
      %1384 = vmatprep.mubr.f32.mxu0 0.0
      %1385 = vmatmul.mubr.f32.gmra.mxu0 %v729
      %v1386 = vpop.f32.mrf.mxu0
      %v1387 = vadd.f32 0.0, %v1386
      %v1388 = vpop.f32.mrf.mxu0
      %1389 = vmatprep.mubr.f32.mxu0 0.0
      %1390 = vmatmul.mubr.f32.gmra.mxu0 %v731
      %v1391 = vpop.f32.mrf.mxu0
      %v1392 = vadd.f32 0.0, %v1391
      %v1393 = vpop.f32.mrf.mxu0
      %1394 = vmatprep.mubr.f32.mxu0 0.0
      %1395 = vmatmul.mubr.f32.gmra.mxu0 %v733
      %v1396 = vpop.f32.mrf.mxu0
      %v1397 = vadd.f32 0.0, %v1396
      %v1398 = vpop.f32.mrf.mxu0
      %1399 = vmatprep.mubr.f32.mxu0 0.0
      %1400 = vmatmul.mubr.f32.gmra.mxu0 %v735
      %v1401 = vpop.f32.mrf.mxu0
      %v1402 = vadd.f32 0.0, %v1401
      %v1403 = vpop.f32.mrf.mxu0
      %1404 = vmatprep.mubr.f32.mxu0 0.0
      %1405 = vmatmul.mubr.f32.gmra.mxu0 %v737
      %v1406 = vpop.f32.mrf.mxu0
      %v1407 = vadd.f32 0.0, %v1406
      %v1408 = vpop.f32.mrf.mxu0
      %1409 = vmatprep.mubr.f32.mxu0 0.0
      %1410 = vmatmul.mubr.f32.gmra.mxu0 %v739
      %v1411 = vpop.f32.mrf.mxu0
      %v1412 = vadd.f32 0.0, %v1411
      %v1413 = vpop.f32.mrf.mxu0
      %1414 = vmatprep.mubr.f32.mxu0 0.0
      %1415 = vmatmul.mubr.f32.gmra.mxu0 %v741
      %v1416 = vpop.f32.mrf.mxu0
      %v1417 = vadd.f32 0.0, %v1416
      %v1418 = vpop.f32.mrf.mxu0
      %1419 = vmatprep.mubr.f32.mxu0 0.0
      %1420 = vmatmul.mubr.f32.gmra.mxu0 %v1278
      %v1421 = vpop.f32.mrf.mxu0
      %v1422 = vadd.f32 0.0, %v1421
      %v1423 = vpop.f32.mrf.mxu0
      %1424 = vmatprep.mubr.f32.mxu0 0.0
      %1425 = vmatmul.mubr.f32.gmra.mxu0 %v1280
      %v1426 = vpop.f32.mrf.mxu0
      %v1427 = vadd.f32 0.0, %v1426
      %v1428 = vpop.f32.mrf.mxu0
      %1429 = vdwg.mxu0
      %v1430 = vadd.f32 %v1255, %v1352
      %v1431 = vadd.f32 %v1256, %v1357
      %v1432 = vadd.f32 %v1257, %v1362
      %v1433 = vadd.f32 %v1258, %v1367
      %v1434 = vadd.f32 %v1259, %v1372
      %v1435 = vadd.f32 %v1260, %v1377
      %v1436 = vadd.f32 %v1261, %v1382
      %v1437 = vadd.f32 %v1262, %v1387
      %v1438 = vadd.f32 %v1263, %v1392
      %v1439 = vadd.f32 %v1264, %v1397
      %v1440 = vadd.f32 %v1265, %v1402
      %v1441 = vadd.f32 %v1266, %v1407
      %v1442 = vadd.f32 %v1267, %v1412
      %v1443 = vadd.f32 %v1268, %v1417
      %v1444 = vadd.f32 %v1269, %v1422
      %v1445 = vadd.f32 %v1270, %v1427
      %s1446 = scalar_lea.vmem %s1, 24
      %v1447 = vld [vmem:[%s1446] sm:$0xf]
      %v1449 = vsel %vm306, %v235, 0
      %v1452 = vsel %vm306, %v236, 0
      %v1455 = vsel %vm339, %v1447, 0
      %1457 = vmatprep.subr.mxu0 0.0
      %1458 = vmatpush1.msra.mxu0 0.0
      %1459 = vmatprep.subr.mxu0 0.0
      %1460 = vmatpush1.msra.mxu0 0.0
      %1461 = vmatprep.subr.mxu0 0.0
      %1462 = vmatpush1.msra.mxu0 0.0
      %1463 = vmatprep.subr.mxu0 0.0
      %1464 = vmatpush1.msra.mxu0 0.0
      %1465 = vmatprep.subr.mxu0 0.0
      %1466 = vmatpush1.msra.mxu0 0.0
      %1467 = vmatprep.subr.mxu0 0.0
      %1468 = vmatpush1.msra.mxu0 0.0
      %1469 = vmatprep.subr.mxu0 0.0
      %1470 = vmatpush1.msra.mxu0 0.0
      %1471 = vmatprep.subr.mxu0 0.0
      %1472 = vmatpush1.msra.mxu0 0.0
      %1473 = vmatprep.subr.mxu0 0.0
      %1474 = vmatpush1.msra.mxu0 0.0
      %1475 = vmatprep.subr.mxu0 0.0
      %1476 = vmatpush1.msra.mxu0 0.0
      %1477 = vmatprep.subr.mxu0 0.0
      %1478 = vmatpush1.msra.mxu0 0.0
      %1479 = vmatprep.subr.mxu0 0.0
      %1480 = vmatpush1.msra.mxu0 0.0
      %1481 = vmatprep.subr.mxu0 0.0
      %1482 = vmatpush1.msra.mxu0 0.0
      %1483 = vmatprep.subr.mxu0 0.0
      %1484 = vmatpush1.msra.mxu0 0.0
      %1485 = vmatprep.subr.mxu0 0.0
      %1486 = vmatpush1.msra.mxu0 0.0
      %1487 = vmatprep.subr.mxu0 0.0
      %1488 = vmatpush1.msra.mxu0 %v1455
      %1489 = vmatprep.subr.mxu0 0.0
      %1490 = vmatpush2.msra.mxu0 0.0
      %1491 = vmatprep.subr.mxu0 0.0
      %1492 = vmatpush2.msra.mxu0 0.0
      %1493 = vmatprep.subr.mxu0 0.0
      %1494 = vmatpush2.msra.mxu0 0.0
      %1495 = vmatprep.subr.mxu0 0.0
      %1496 = vmatpush2.msra.mxu0 0.0
      %1497 = vmatprep.subr.mxu0 0.0
      %1498 = vmatpush2.msra.mxu0 0.0
      %1499 = vmatprep.subr.mxu0 0.0
      %1500 = vmatpush2.msra.mxu0 0.0
      %1501 = vmatprep.subr.mxu0 0.0
      %1502 = vmatpush2.msra.mxu0 0.0
      %1503 = vmatprep.subr.mxu0 0.0
      %1504 = vmatpush2.msra.mxu0 0.0
      %1505 = vmatprep.subr.mxu0 0.0
      %1506 = vmatpush2.msra.mxu0 0.0
      %1507 = vmatprep.subr.mxu0 0.0
      %1508 = vmatpush2.msra.mxu0 0.0
      %1509 = vmatprep.subr.mxu0 0.0
      %1510 = vmatpush2.msra.mxu0 0.0
      %1511 = vmatprep.subr.mxu0 0.0
      %1512 = vmatpush2.msra.mxu0 0.0
      %1513 = vmatprep.subr.mxu0 0.0
      %1514 = vmatpush2.msra.mxu0 0.0
      %1515 = vmatprep.subr.mxu0 0.0
      %1516 = vmatpush2.msra.mxu0 0.0
      %1517 = vmatprep.subr.mxu0 0.0
      %1518 = vmatpush2.msra.mxu0 0.0
      %1519 = vmatprep.subr.mxu0 0.0
      %1520 = vmatpush2.msra.mxu0 0.0
      %1521 = vmatprep.mubr.f32.mxu0 0.0
      %1522 = vmatmul.mubr.f32.gmra.mxu0 %v496
      %v1523 = vpop.f32.mrf.mxu0
      %v1524 = vadd.f32 0.0, %v1523
      %v1525 = vpop.f32.mrf.mxu0
      %1526 = vmatprep.mubr.f32.mxu0 0.0
      %1527 = vmatmul.mubr.f32.gmra.mxu0 %v498
      %v1528 = vpop.f32.mrf.mxu0
      %v1529 = vadd.f32 0.0, %v1528
      %v1530 = vpop.f32.mrf.mxu0
      %1531 = vmatprep.mubr.f32.mxu0 0.0
      %1532 = vmatmul.mubr.f32.gmra.mxu0 %v500
      %v1533 = vpop.f32.mrf.mxu0
      %v1534 = vadd.f32 0.0, %v1533
      %v1535 = vpop.f32.mrf.mxu0
      %1536 = vmatprep.mubr.f32.mxu0 0.0
      %1537 = vmatmul.mubr.f32.gmra.mxu0 %v502
      %v1538 = vpop.f32.mrf.mxu0
      %v1539 = vadd.f32 0.0, %v1538
      %v1540 = vpop.f32.mrf.mxu0
      %1541 = vmatprep.mubr.f32.mxu0 0.0
      %1542 = vmatmul.mubr.f32.gmra.mxu0 %v504
      %v1543 = vpop.f32.mrf.mxu0
      %v1544 = vadd.f32 0.0, %v1543
      %v1545 = vpop.f32.mrf.mxu0
      %1546 = vmatprep.mubr.f32.mxu0 0.0
      %1547 = vmatmul.mubr.f32.gmra.mxu0 %v506
      %v1548 = vpop.f32.mrf.mxu0
      %v1549 = vadd.f32 0.0, %v1548
      %v1550 = vpop.f32.mrf.mxu0
      %1551 = vmatprep.mubr.f32.mxu0 0.0
      %1552 = vmatmul.mubr.f32.gmra.mxu0 %v508
      %v1553 = vpop.f32.mrf.mxu0
      %v1554 = vadd.f32 0.0, %v1553
      %v1555 = vpop.f32.mrf.mxu0
      %1556 = vmatprep.mubr.f32.mxu0 0.0
      %1557 = vmatmul.mubr.f32.gmra.mxu0 %v510
      %v1558 = vpop.f32.mrf.mxu0
      %v1559 = vadd.f32 0.0, %v1558
      %v1560 = vpop.f32.mrf.mxu0
      %1561 = vmatprep.mubr.f32.mxu0 0.0
      %1562 = vmatmul.mubr.f32.gmra.mxu0 %v512
      %v1563 = vpop.f32.mrf.mxu0
      %v1564 = vadd.f32 0.0, %v1563
      %v1565 = vpop.f32.mrf.mxu0
      %1566 = vmatprep.mubr.f32.mxu0 0.0
      %1567 = vmatmul.mubr.f32.gmra.mxu0 %v514
      %v1568 = vpop.f32.mrf.mxu0
      %v1569 = vadd.f32 0.0, %v1568
      %v1570 = vpop.f32.mrf.mxu0
      %1571 = vmatprep.mubr.f32.mxu0 0.0
      %1572 = vmatmul.mubr.f32.gmra.mxu0 %v516
      %v1573 = vpop.f32.mrf.mxu0
      %v1574 = vadd.f32 0.0, %v1573
      %v1575 = vpop.f32.mrf.mxu0
      %1576 = vmatprep.mubr.f32.mxu0 0.0
      %1577 = vmatmul.mubr.f32.gmra.mxu0 %v518
      %v1578 = vpop.f32.mrf.mxu0
      %v1579 = vadd.f32 0.0, %v1578
      %v1580 = vpop.f32.mrf.mxu0
      %1581 = vmatprep.mubr.f32.mxu0 0.0
      %1582 = vmatmul.mubr.f32.gmra.mxu0 %v910
      %v1583 = vpop.f32.mrf.mxu0
      %v1584 = vadd.f32 0.0, %v1583
      %v1585 = vpop.f32.mrf.mxu0
      %1586 = vmatprep.mubr.f32.mxu0 0.0
      %1587 = vmatmul.mubr.f32.gmra.mxu0 %v913
      %v1588 = vpop.f32.mrf.mxu0
      %v1589 = vadd.f32 0.0, %v1588
      %v1590 = vpop.f32.mrf.mxu0
      %1591 = vmatprep.mubr.f32.mxu0 0.0
      %1592 = vmatmul.mubr.f32.gmra.mxu0 %v1449
      %v1593 = vpop.f32.mrf.mxu0
      %v1594 = vadd.f32 0.0, %v1593
      %v1595 = vpop.f32.mrf.mxu0
      %1596 = vmatprep.mubr.f32.mxu0 0.0
      %1597 = vmatmul.mubr.f32.gmra.mxu0 %v1452
      %v1598 = vpop.f32.mrf.mxu0
      %v1599 = vadd.f32 0.0, %v1598
      %v1600 = vpop.f32.mrf.mxu0
      %1601 = vdwg.mxu0
      %v1602 = vadd.f32 %v1430, %v1524
      %v1603 = vadd.f32 %v1431, %v1529
      %v1604 = vadd.f32 %v1432, %v1534
      %v1605 = vadd.f32 %v1433, %v1539
      %v1606 = vadd.f32 %v1434, %v1544
      %v1607 = vadd.f32 %v1435, %v1549
      %v1608 = vadd.f32 %v1436, %v1554
      %v1609 = vadd.f32 %v1437, %v1559
      %v1610 = vadd.f32 %v1438, %v1564
      %v1611 = vadd.f32 %v1439, %v1569
      %v1612 = vadd.f32 %v1440, %v1574
      %v1613 = vadd.f32 %v1441, %v1579
      %v1614 = vadd.f32 %v1442, %v1584
      %v1615 = vadd.f32 %v1443, %v1589
      %v1616 = vadd.f32 %v1444, %v1594
      %v1617 = vadd.f32 %v1445, %v1599
      %v1619 = vrot.slane %v235, 1
      %v1620 = vrot.slane %v236, 1
      %v1621 = vsel %vm263, %v1619, %v1620
      %v1622 = vrot.slane %v237, 1
      %v1623 = vsel %vm263, %v1620, %v1622
      %s1624 = scalar_lea.vmem %s1, 28
      %v1625 = vld [vmem:[%s1624] sm:$0xf]
      %v1626 = vsel %vm306, %v1621, 0
      %v1628 = vsel %vm306, %v1623, 0
      %v1631 = vsel %vm339, %v1625, 0
      %1633 = vmatprep.subr.mxu0 0.0
      %1634 = vmatpush1.msra.mxu0 0.0
      %1635 = vmatprep.subr.mxu0 0.0
      %1636 = vmatpush1.msra.mxu0 0.0
      %1637 = vmatprep.subr.mxu0 0.0
      %1638 = vmatpush1.msra.mxu0 0.0
      %1639 = vmatprep.subr.mxu0 0.0
      %1640 = vmatpush1.msra.mxu0 0.0
      %1641 = vmatprep.subr.mxu0 0.0
      %1642 = vmatpush1.msra.mxu0 0.0
      %1643 = vmatprep.subr.mxu0 0.0
      %1644 = vmatpush1.msra.mxu0 0.0
      %1645 = vmatprep.subr.mxu0 0.0
      %1646 = vmatpush1.msra.mxu0 0.0
      %1647 = vmatprep.subr.mxu0 0.0
      %1648 = vmatpush1.msra.mxu0 0.0
      %1649 = vmatprep.subr.mxu0 0.0
      %1650 = vmatpush1.msra.mxu0 0.0
      %1651 = vmatprep.subr.mxu0 0.0
      %1652 = vmatpush1.msra.mxu0 0.0
      %1653 = vmatprep.subr.mxu0 0.0
      %1654 = vmatpush1.msra.mxu0 0.0
      %1655 = vmatprep.subr.mxu0 0.0
      %1656 = vmatpush1.msra.mxu0 0.0
      %1657 = vmatprep.subr.mxu0 0.0
      %1658 = vmatpush1.msra.mxu0 0.0
      %1659 = vmatprep.subr.mxu0 0.0
      %1660 = vmatpush1.msra.mxu0 0.0
      %1661 = vmatprep.subr.mxu0 0.0
      %1662 = vmatpush1.msra.mxu0 0.0
      %1663 = vmatprep.subr.mxu0 0.0
      %1664 = vmatpush1.msra.mxu0 %v1631
      %1665 = vmatprep.subr.mxu0 0.0
      %1666 = vmatpush2.msra.mxu0 0.0
      %1667 = vmatprep.subr.mxu0 0.0
      %1668 = vmatpush2.msra.mxu0 0.0
      %1669 = vmatprep.subr.mxu0 0.0
      %1670 = vmatpush2.msra.mxu0 0.0
      %1671 = vmatprep.subr.mxu0 0.0
      %1672 = vmatpush2.msra.mxu0 0.0
      %1673 = vmatprep.subr.mxu0 0.0
      %1674 = vmatpush2.msra.mxu0 0.0
      %1675 = vmatprep.subr.mxu0 0.0
      %1676 = vmatpush2.msra.mxu0 0.0
      %1677 = vmatprep.subr.mxu0 0.0
      %1678 = vmatpush2.msra.mxu0 0.0
      %1679 = vmatprep.subr.mxu0 0.0
      %1680 = vmatpush2.msra.mxu0 0.0
      %1681 = vmatprep.subr.mxu0 0.0
      %1682 = vmatpush2.msra.mxu0 0.0
      %1683 = vmatprep.subr.mxu0 0.0
      %1684 = vmatpush2.msra.mxu0 0.0
      %1685 = vmatprep.subr.mxu0 0.0
      %1686 = vmatpush2.msra.mxu0 0.0
      %1687 = vmatprep.subr.mxu0 0.0
      %1688 = vmatpush2.msra.mxu0 0.0
      %1689 = vmatprep.subr.mxu0 0.0
      %1690 = vmatpush2.msra.mxu0 0.0
      %1691 = vmatprep.subr.mxu0 0.0
      %1692 = vmatpush2.msra.mxu0 0.0
      %1693 = vmatprep.subr.mxu0 0.0
      %1694 = vmatpush2.msra.mxu0 0.0
      %1695 = vmatprep.subr.mxu0 0.0
      %1696 = vmatpush2.msra.mxu0 0.0
      %1697 = vmatprep.mubr.f32.mxu0 0.0
      %1698 = vmatmul.mubr.f32.gmra.mxu0 %v315
      %v1699 = vpop.f32.mrf.mxu0
      %v1700 = vadd.f32 0.0, %v1699
      %v1701 = vpop.f32.mrf.mxu0
      %1702 = vmatprep.mubr.f32.mxu0 0.0
      %1703 = vmatmul.mubr.f32.gmra.mxu0 %v317
      %v1704 = vpop.f32.mrf.mxu0
      %v1705 = vadd.f32 0.0, %v1704
      %v1706 = vpop.f32.mrf.mxu0
      %1707 = vmatprep.mubr.f32.mxu0 0.0
      %1708 = vmatmul.mubr.f32.gmra.mxu0 %v319
      %v1709 = vpop.f32.mrf.mxu0
      %v1710 = vadd.f32 0.0, %v1709
      %v1711 = vpop.f32.mrf.mxu0
      %1712 = vmatprep.mubr.f32.mxu0 0.0
      %1713 = vmatmul.mubr.f32.gmra.mxu0 %v321
      %v1714 = vpop.f32.mrf.mxu0
      %v1715 = vadd.f32 0.0, %v1714
      %v1716 = vpop.f32.mrf.mxu0
      %1717 = vmatprep.mubr.f32.mxu0 0.0
      %1718 = vmatmul.mubr.f32.gmra.mxu0 %v323
      %v1719 = vpop.f32.mrf.mxu0
      %v1720 = vadd.f32 0.0, %v1719
      %v1721 = vpop.f32.mrf.mxu0
      %1722 = vmatprep.mubr.f32.mxu0 0.0
      %1723 = vmatmul.mubr.f32.gmra.mxu0 %v325
      %v1724 = vpop.f32.mrf.mxu0
      %v1725 = vadd.f32 0.0, %v1724
      %v1726 = vpop.f32.mrf.mxu0
      %1727 = vmatprep.mubr.f32.mxu0 0.0
      %1728 = vmatmul.mubr.f32.gmra.mxu0 %v327
      %v1729 = vpop.f32.mrf.mxu0
      %v1730 = vadd.f32 0.0, %v1729
      %v1731 = vpop.f32.mrf.mxu0
      %1732 = vmatprep.mubr.f32.mxu0 0.0
      %1733 = vmatmul.mubr.f32.gmra.mxu0 %v329
      %v1734 = vpop.f32.mrf.mxu0
      %v1735 = vadd.f32 0.0, %v1734
      %v1736 = vpop.f32.mrf.mxu0
      %1737 = vmatprep.mubr.f32.mxu0 0.0
      %1738 = vmatmul.mubr.f32.gmra.mxu0 %v331
      %v1739 = vpop.f32.mrf.mxu0
      %v1740 = vadd.f32 0.0, %v1739
      %v1741 = vpop.f32.mrf.mxu0
      %1742 = vmatprep.mubr.f32.mxu0 0.0
      %1743 = vmatmul.mubr.f32.gmra.mxu0 %v333
      %v1744 = vpop.f32.mrf.mxu0
      %v1745 = vadd.f32 0.0, %v1744
      %v1746 = vpop.f32.mrf.mxu0
      %1747 = vmatprep.mubr.f32.mxu0 0.0
      %1748 = vmatmul.mubr.f32.gmra.mxu0 %v335
      %v1749 = vpop.f32.mrf.mxu0
      %v1750 = vadd.f32 0.0, %v1749
      %v1751 = vpop.f32.mrf.mxu0
      %1752 = vmatprep.mubr.f32.mxu0 0.0
      %1753 = vmatmul.mubr.f32.gmra.mxu0 %v337
      %v1754 = vpop.f32.mrf.mxu0
      %v1755 = vadd.f32 0.0, %v1754
      %v1756 = vpop.f32.mrf.mxu0
      %1757 = vmatprep.mubr.f32.mxu0 0.0
      %1758 = vmatmul.mubr.f32.gmra.mxu0 %v1103
      %v1759 = vpop.f32.mrf.mxu0
      %v1760 = vadd.f32 0.0, %v1759
      %v1761 = vpop.f32.mrf.mxu0
      %1762 = vmatprep.mubr.f32.mxu0 0.0
      %1763 = vmatmul.mubr.f32.gmra.mxu0 %v1105
      %v1764 = vpop.f32.mrf.mxu0
      %v1765 = vadd.f32 0.0, %v1764
      %v1766 = vpop.f32.mrf.mxu0
      %1767 = vmatprep.mubr.f32.mxu0 0.0
      %1768 = vmatmul.mubr.f32.gmra.mxu0 %v1626
      %v1769 = vpop.f32.mrf.mxu0
      %v1770 = vadd.f32 0.0, %v1769
      %v1771 = vpop.f32.mrf.mxu0
      %1772 = vmatprep.mubr.f32.mxu0 0.0
      %1773 = vmatmul.mubr.f32.gmra.mxu0 %v1628
      %v1774 = vpop.f32.mrf.mxu0
      %v1775 = vadd.f32 0.0, %v1774
      %v1776 = vpop.f32.mrf.mxu0
      %1777 = vdwg.mxu0
      %v1778 = vadd.f32 %v1602, %v1700
      %v1779 = vadd.f32 %v1603, %v1705
      %v1780 = vadd.f32 %v1604, %v1710
      %v1781 = vadd.f32 %v1605, %v1715
      %v1782 = vadd.f32 %v1606, %v1720
      %v1783 = vadd.f32 %v1607, %v1725
      %v1784 = vadd.f32 %v1608, %v1730
      %v1785 = vadd.f32 %v1609, %v1735
      %v1786 = vadd.f32 %v1610, %v1740
      %v1787 = vadd.f32 %v1611, %v1745
      %v1788 = vadd.f32 %v1612, %v1750
      %v1789 = vadd.f32 %v1613, %v1755
      %v1790 = vadd.f32 %v1614, %v1760
      %v1791 = vadd.f32 %v1615, %v1765
      %v1792 = vadd.f32 %v1616, %v1770
      %v1793 = vadd.f32 %v1617, %v1775
      %v1794 = vrot.slane %v235, 2
      %v1795 = vrot.slane %v236, 2
      %v1796 = vsel %vm668, %v1794, %v1795
      %v1797 = vrot.slane %v237, 2
      %v1798 = vsel %vm668, %v1795, %v1797
      %s1799 = scalar_lea.vmem %s1, 32
      %v1800 = vld [vmem:[%s1799] sm:$0xf]
      %v1801 = vsel %vm306, %v1796, 0
      %v1803 = vsel %vm306, %v1798, 0
      %v1806 = vsel %vm339, %v1800, 0
      %1808 = vmatprep.subr.mxu0 0.0
      %1809 = vmatpush1.msra.mxu0 0.0
      %1810 = vmatprep.subr.mxu0 0.0
      %1811 = vmatpush1.msra.mxu0 0.0
      %1812 = vmatprep.subr.mxu0 0.0
      %1813 = vmatpush1.msra.mxu0 0.0
      %1814 = vmatprep.subr.mxu0 0.0
      %1815 = vmatpush1.msra.mxu0 0.0
      %1816 = vmatprep.subr.mxu0 0.0
      %1817 = vmatpush1.msra.mxu0 0.0
      %1818 = vmatprep.subr.mxu0 0.0
      %1819 = vmatpush1.msra.mxu0 0.0
      %1820 = vmatprep.subr.mxu0 0.0
      %1821 = vmatpush1.msra.mxu0 0.0
      %1822 = vmatprep.subr.mxu0 0.0
      %1823 = vmatpush1.msra.mxu0 0.0
      %1824 = vmatprep.subr.mxu0 0.0
      %1825 = vmatpush1.msra.mxu0 0.0
      %1826 = vmatprep.subr.mxu0 0.0
      %1827 = vmatpush1.msra.mxu0 0.0
      %1828 = vmatprep.subr.mxu0 0.0
      %1829 = vmatpush1.msra.mxu0 0.0
      %1830 = vmatprep.subr.mxu0 0.0
      %1831 = vmatpush1.msra.mxu0 0.0
      %1832 = vmatprep.subr.mxu0 0.0
      %1833 = vmatpush1.msra.mxu0 0.0
      %1834 = vmatprep.subr.mxu0 0.0
      %1835 = vmatpush1.msra.mxu0 0.0
      %1836 = vmatprep.subr.mxu0 0.0
      %1837 = vmatpush1.msra.mxu0 0.0
      %1838 = vmatprep.subr.mxu0 0.0
      %1839 = vmatpush1.msra.mxu0 %v1806
      %1840 = vmatprep.subr.mxu0 0.0
      %1841 = vmatpush2.msra.mxu0 0.0
      %1842 = vmatprep.subr.mxu0 0.0
      %1843 = vmatpush2.msra.mxu0 0.0
      %1844 = vmatprep.subr.mxu0 0.0
      %1845 = vmatpush2.msra.mxu0 0.0
      %1846 = vmatprep.subr.mxu0 0.0
      %1847 = vmatpush2.msra.mxu0 0.0
      %1848 = vmatprep.subr.mxu0 0.0
      %1849 = vmatpush2.msra.mxu0 0.0
      %1850 = vmatprep.subr.mxu0 0.0
      %1851 = vmatpush2.msra.mxu0 0.0
      %1852 = vmatprep.subr.mxu0 0.0
      %1853 = vmatpush2.msra.mxu0 0.0
      %1854 = vmatprep.subr.mxu0 0.0
      %1855 = vmatpush2.msra.mxu0 0.0
      %1856 = vmatprep.subr.mxu0 0.0
      %1857 = vmatpush2.msra.mxu0 0.0
      %1858 = vmatprep.subr.mxu0 0.0
      %1859 = vmatpush2.msra.mxu0 0.0
      %1860 = vmatprep.subr.mxu0 0.0
      %1861 = vmatpush2.msra.mxu0 0.0
      %1862 = vmatprep.subr.mxu0 0.0
      %1863 = vmatpush2.msra.mxu0 0.0
      %1864 = vmatprep.subr.mxu0 0.0
      %1865 = vmatpush2.msra.mxu0 0.0
      %1866 = vmatprep.subr.mxu0 0.0
      %1867 = vmatpush2.msra.mxu0 0.0
      %1868 = vmatprep.subr.mxu0 0.0
      %1869 = vmatpush2.msra.mxu0 0.0
      %1870 = vmatprep.subr.mxu0 0.0
      %1871 = vmatpush2.msra.mxu0 0.0
      %1872 = vmatprep.mubr.f32.mxu0 0.0
      %1873 = vmatmul.mubr.f32.gmra.mxu0 %v719
      %v1874 = vpop.f32.mrf.mxu0
      %v1875 = vadd.f32 0.0, %v1874
      %v1876 = vpop.f32.mrf.mxu0
      %1877 = vmatprep.mubr.f32.mxu0 0.0
      %1878 = vmatmul.mubr.f32.gmra.mxu0 %v721
      %v1879 = vpop.f32.mrf.mxu0
      %v1880 = vadd.f32 0.0, %v1879
      %v1881 = vpop.f32.mrf.mxu0
      %1882 = vmatprep.mubr.f32.mxu0 0.0
      %1883 = vmatmul.mubr.f32.gmra.mxu0 %v723
      %v1884 = vpop.f32.mrf.mxu0
      %v1885 = vadd.f32 0.0, %v1884
      %v1886 = vpop.f32.mrf.mxu0
      %1887 = vmatprep.mubr.f32.mxu0 0.0
      %1888 = vmatmul.mubr.f32.gmra.mxu0 %v725
      %v1889 = vpop.f32.mrf.mxu0
      %v1890 = vadd.f32 0.0, %v1889
      %v1891 = vpop.f32.mrf.mxu0
      %1892 = vmatprep.mubr.f32.mxu0 0.0
      %1893 = vmatmul.mubr.f32.gmra.mxu0 %v727
      %v1894 = vpop.f32.mrf.mxu0
      %v1895 = vadd.f32 0.0, %v1894
      %v1896 = vpop.f32.mrf.mxu0
      %1897 = vmatprep.mubr.f32.mxu0 0.0
      %1898 = vmatmul.mubr.f32.gmra.mxu0 %v729
      %v1899 = vpop.f32.mrf.mxu0
      %v1900 = vadd.f32 0.0, %v1899
      %v1901 = vpop.f32.mrf.mxu0
      %1902 = vmatprep.mubr.f32.mxu0 0.0
      %1903 = vmatmul.mubr.f32.gmra.mxu0 %v731
      %v1904 = vpop.f32.mrf.mxu0
      %v1905 = vadd.f32 0.0, %v1904
      %v1906 = vpop.f32.mrf.mxu0
      %1907 = vmatprep.mubr.f32.mxu0 0.0
      %1908 = vmatmul.mubr.f32.gmra.mxu0 %v733
      %v1909 = vpop.f32.mrf.mxu0
      %v1910 = vadd.f32 0.0, %v1909
      %v1911 = vpop.f32.mrf.mxu0
      %1912 = vmatprep.mubr.f32.mxu0 0.0
      %1913 = vmatmul.mubr.f32.gmra.mxu0 %v735
      %v1914 = vpop.f32.mrf.mxu0
      %v1915 = vadd.f32 0.0, %v1914
      %v1916 = vpop.f32.mrf.mxu0
      %1917 = vmatprep.mubr.f32.mxu0 0.0
      %1918 = vmatmul.mubr.f32.gmra.mxu0 %v737
      %v1919 = vpop.f32.mrf.mxu0
      %v1920 = vadd.f32 0.0, %v1919
      %v1921 = vpop.f32.mrf.mxu0
      %1922 = vmatprep.mubr.f32.mxu0 0.0
      %1923 = vmatmul.mubr.f32.gmra.mxu0 %v739
      %v1924 = vpop.f32.mrf.mxu0
      %v1925 = vadd.f32 0.0, %v1924
      %v1926 = vpop.f32.mrf.mxu0
      %1927 = vmatprep.mubr.f32.mxu0 0.0
      %1928 = vmatmul.mubr.f32.gmra.mxu0 %v741
      %v1929 = vpop.f32.mrf.mxu0
      %v1930 = vadd.f32 0.0, %v1929
      %v1931 = vpop.f32.mrf.mxu0
      %1932 = vmatprep.mubr.f32.mxu0 0.0
      %1933 = vmatmul.mubr.f32.gmra.mxu0 %v1278
      %v1934 = vpop.f32.mrf.mxu0
      %v1935 = vadd.f32 0.0, %v1934
      %v1936 = vpop.f32.mrf.mxu0
      %1937 = vmatprep.mubr.f32.mxu0 0.0
      %1938 = vmatmul.mubr.f32.gmra.mxu0 %v1280
      %v1939 = vpop.f32.mrf.mxu0
      %v1940 = vadd.f32 0.0, %v1939
      %v1941 = vpop.f32.mrf.mxu0
      %1942 = vmatprep.mubr.f32.mxu0 0.0
      %1943 = vmatmul.mubr.f32.gmra.mxu0 %v1801
      %v1944 = vpop.f32.mrf.mxu0
      %v1945 = vadd.f32 0.0, %v1944
      %v1946 = vpop.f32.mrf.mxu0
      %1947 = vmatprep.mubr.f32.mxu0 0.0
      %1948 = vmatmul.mubr.f32.gmra.mxu0 %v1803
      %v1949 = vpop.f32.mrf.mxu0
      %v1950 = vadd.f32 0.0, %v1949
      %v1951 = vpop.f32.mrf.mxu0
      %1952 = vdwg.mxu0
      %v1953 = vadd.f32 %v1778, %v1875
      %v1954 = vadd.f32 %v1779, %v1880
      %v1955 = vadd.f32 %v1780, %v1885
      %v1956 = vadd.f32 %v1781, %v1890
      %v1957 = vadd.f32 %v1782, %v1895
      %v1958 = vadd.f32 %v1783, %v1900
      %v1959 = vadd.f32 %v1784, %v1905
      %v1960 = vadd.f32 %v1785, %v1910
      %v1961 = vadd.f32 %v1786, %v1915
      %v1962 = vadd.f32 %v1787, %v1920
      %v1963 = vadd.f32 %v1788, %v1925
      %v1964 = vadd.f32 %v1789, %v1930
      %v1965 = vadd.f32 %v1790, %v1935
      %v1966 = vadd.f32 %v1791, %v1940
      %v1967 = vadd.f32 %v1792, %v1945
      %v1968 = vadd.f32 %v1793, %v1950
      %v1969 = vld [vmem:[%s2] sm:$0x1]
      %v1971 = vlaneseq
      %v1972 = vshrl.u32 %v1971, 7
      %v1973 = vsub.s32 0, %v1972
      %v1974 = vrot.slane %v1969, %v1973
      %v1976 = vadd.f32 %v1953, %v1974
      %v1977 = vadd.f32 %v1954, %v1974
      %v1978 = vadd.f32 %v1955, %v1974
      %v1979 = vadd.f32 %v1956, %v1974
      %v1980 = vadd.f32 %v1957, %v1974
      %v1981 = vadd.f32 %v1958, %v1974
      %v1982 = vadd.f32 %v1959, %v1974
      %v1983 = vadd.f32 %v1960, %v1974
      %v1984 = vadd.f32 %v1961, %v1974
      %v1985 = vadd.f32 %v1962, %v1974
      %v1986 = vadd.f32 %v1963, %v1974
      %v1987 = vadd.f32 %v1964, %v1974
      %v1988 = vadd.f32 %v1965, %v1974
      %v1989 = vadd.f32 %v1966, %v1974
      %v1990 = vadd.f32 %v1967, %v1974
      %v1991 = vadd.f32 %v1968, %v1974
      %v1992 = vadd.f32 %v1976, %v271
      %v1993 = vadd.f32 %v1977, %v273
      %v1994 = vadd.f32 %v1978, %v276
      %v1995 = vadd.f32 %v1979, %v278
      %v1996 = vadd.f32 %v1980, %v281
      %v1997 = vadd.f32 %v1981, %v283
      %v1998 = vadd.f32 %v1982, %v286
      %v1999 = vadd.f32 %v1983, %v288
      %v2000 = vadd.f32 %v1984, %v291
      %v2001 = vadd.f32 %v1985, %v293
      %v2002 = vadd.f32 %v1986, %v296
      %v2003 = vadd.f32 %v1987, %v298
      %v2004 = vadd.f32 %v1988, %v301
      %v2005 = vadd.f32 %v1989, %v303
      %v2006 = vadd.f32 %v1990, %v1082
      %v2007 = vadd.f32 %v1991, %v1084
      %2008 = vst.msk [vmem:[%s206] sm:$0xff] %vm306, %v1992
      %2009 = vst.msk [vmem:[%s206 + $0x8] sm:$0xff] %vm306, %v1993
      %2010 = vst.msk [vmem:[%s206 + $0x10] sm:$0xff] %vm306, %v1994
      %2011 = vst.msk [vmem:[%s206 + $0x18] sm:$0xff] %vm306, %v1995
      %2012 = vst.msk [vmem:[%s206 + $0x20] sm:$0xff] %vm306, %v1996
      %2013 = vst.msk [vmem:[%s206 + $0x28] sm:$0xff] %vm306, %v1997
      %2014 = vst.msk [vmem:[%s206 + $0x30] sm:$0xff] %vm306, %v1998
      %2015 = vst.msk [vmem:[%s206 + $0x38] sm:$0xff] %vm306, %v1999
      %2016 = vst.msk [vmem:[%s206 + $0x40] sm:$0xff] %vm306, %v2000
      %2017 = vst.msk [vmem:[%s206 + $0x48] sm:$0xff] %vm306, %v2001
      %2018 = vst.msk [vmem:[%s206 + $0x50] sm:$0xff] %vm306, %v2002
      %2019 = vst.msk [vmem:[%s206 + $0x58] sm:$0xff] %vm306, %v2003
      %2020 = vst.msk [vmem:[%s206 + $0x60] sm:$0xff] %vm306, %v2004
      %2021 = vst.msk [vmem:[%s206 + $0x68] sm:$0xff] %vm306, %v2005
      %2022 = vst.msk [vmem:[%s206 + $0x70] sm:$0xff] %vm306, %v2006
      %2023 = vst.msk [vmem:[%s206 + $0x78] sm:$0xff] %vm306, %v2007
      %s2024 = smul.u32 16, %s19
      %p2025 = scmp.lt.s32.totalorder %s18, 1
      %s2026 = scalar_select %p2025, %s18, 1
      %p2027 = scmp.lt.s32.totalorder %s2024, 31
      %s2028 = scalar_select %p2027, %s2024, 31
      %s2029 = smul.addr %s2026, 32
      %s2030 = sadd.s32 %s2028, %s2029
      %s2031 = smul.addr %s2030, 8
      %s2032 = scalar_lea.vmem %s3, %s2031
      // Predicated region
      $region33: #{res_block_forward.1} parent=31 // pred_check
        %p2033 = pneg %p116
      $region34: #{res_block_forward.1} parent=31 // pred_check_branch
        %2035 = sbr.rel (%p2033) target = $region36
      $region35: #{res_block_forward.1} parent=31 // pred_region
        %s2036 = smul.u32 16, %s19
      $region36: #{res_block_forward.1} parent=31 // pred_fallthru
        _
    $region32: #{res_block_forward.1} parent=5 // pred_fallthru
      _
    %p2037 = scmp.le.s32.totalorder 2, %s9
    // Predicated region
    $region37: #{res_block_forward.1} parent=5 // pred_check
      %p2038 = pneg %p2037
    $region38: #{res_block_forward.1} parent=5 // pred_check_branch
      %2040 = sbr.rel (%p2038) target = $region40
    $region39: #{res_block_forward.1} parent=5 // pred_region
      %s2041 = ssub.s32 %s9, 2
      // Predicated region
      $region41: #{res_block_forward.1} parent=39 // pred_check
        %p2042 = pneg %p122
      $region42: #{res_block_forward.1} parent=39 // pred_check_branch
        %2044 = sbr.rel (%p2042) target = $region44
      $region43: #{res_block_forward.1} parent=39 // pred_region
        %s2045 = smul.u32 16, %s21
        %p2046 = scmp.lt.s32.totalorder %s20, 1
        %s2047 = scalar_select %p2046, %s20, 1
        %p2048 = scmp.lt.s32.totalorder %s2045, 31
        %s2049 = scalar_select %p2048, %s2045, 31
        %s2050 = smul.addr %s2047, 32
        %s2051 = sadd.s32 %s2049, %s2050
        %s2052 = smul.addr %s2051, 8
        %s2053 = scalar_lea.vmem %s3, %s2052
      $region44: #{res_block_forward.1} parent=39 // pred_fallthru
        _
    $region40: #{res_block_forward.1} parent=5 // pred_fallthru
      _
  $region6: #{res_block_forward.1} parent=0 // loop_footer
    %s13 = sadd.s32 1, %s9
  $region7: #{res_block_forward.1} parent=0 // loop_footer_branch
    %8 = sbr.rel target = $region3
  $region8: #{res_block_forward.1} parent=0 // loop_exit
    _

</llo_original>
